<compile_context>
chip_gen: v7x
topology: tpu7x:2x2x1
jax: 0.10.0
libtpu: 0.0.40
codegen_flags: <defaults>
</compile_context>

<pallas_src>
import functools

import jax
import jax.numpy as jnp
from jax.experimental import pallas as pl
from jax.experimental.pallas import tpu as pltpu

EPS = 1e-5
NEG_SLOPE = 0.01  # nn.LeakyReLU default

# dot_general contracting dim 0 of both operands: (K, M) x (K, N) -> (M, N)
_CONTRACT_0 = (((0,), (0,)), ((), ()))


def _dot_t(a, b):
    return jax.lax.dot_general(a, b, dimension_numbers=_CONTRACT_0,
                               preferred_element_type=jnp.float32)


def _gate_kernel(xin_ref, xg_ref, w1i_ref, w1g_ref, b1_ref, w2_ref, b2_ref,
                 o_ref,
                 acc_m_i, acc_msq_i, acc_m2_i,
                 acc_m_g, acc_msq_g, acc_m2_g,
                 z_m, z_msq, z_m2,
                 w1f_s, wgf_s, b1f_s, z_mu_s, z_zs_s,
                 x_buf, xg_buf, z_buf,
                 *, n_tiles, use_stash):
    ph = pl.program_id(1)          # 0: x stats, 1: compute z, 2: normalize + write
    t = pl.program_id(2)           # spatial tile index
    ts = o_ref.shape[2]            # spatial tile size (lanes)
    inv_t = 1.0 / n_tiles
    inv_s = 1.0 / (n_tiles * ts)

    # ---- per-sample init -------------------------------------------------
    @pl.when((ph == 0) & (t == 0))
    def _init():
        for r in (acc_m_i, acc_msq_i, acc_m2_i,
                  acc_m_g, acc_msq_g, acc_m2_g,
                  z_m, z_msq, z_m2):
            r[...] = jnp.zeros_like(r)

    # ---- phase 0: per-channel statistics of x over the spatial axis ------
    @pl.when(ph == 0)
    def _stats_pass():
        xi_raw = xin_ref[0]                              # (in_ch, TS)
        xg_raw = xg_ref[0]                               # (1, TS)
        if use_stash:
            x_buf[t] = xi_raw                            # keep tile in VMEM so
            xg_buf[t] = xg_raw                           # phase 1 skips HBM
        xi = xi_raw.astype(jnp.float32)
        xg = xg_raw.astype(jnp.float32)
        mi = jnp.mean(xi, axis=1, keepdims=True)         # (in_ch, 1)
        mg = jnp.mean(xg, axis=1, keepdims=True)         # (1, 1)
        di = xi - mi
        dg = xg - mg
        acc_m_i[...] += mi
        acc_msq_i[...] += mi * mi
        acc_m2_i[...] += jnp.sum(di * di, axis=1, keepdims=True)
        acc_m_g[...] += mg
        acc_msq_g[...] += mg * mg
        acc_m2_g[...] += jnp.sum(dg * dg, axis=1, keepdims=True)

    # ---- phase 1 (once per sample): fold InstanceNorm into conv1 ---------
    @pl.when((ph == 1) & (t == 0))
    def _fold():
        mu_i = acc_m_i[...] * inv_t
        var_i = acc_m2_i[...] * inv_s + acc_msq_i[...] * inv_t - mu_i * mu_i
        s_i = jax.lax.rsqrt(var_i + EPS)                  # (in_ch, 1)
        mu_g = acc_m_g[...] * inv_t
        var_g = acc_m2_g[...] * inv_s + acc_msq_g[...] * inv_t - mu_g * mu_g
        s_g = jax.lax.rsqrt(var_g + EPS)                  # (1, 1)

        w1f = w1i_ref[...] * s_i                          # (in_ch, C1): rows scaled
        wgf = w1g_ref[...] * s_g                          # (C1, 1)
        w1f_s[...] = w1f
        wgf_s[...] = wgf
        b1f_s[...] = b1_ref[...] - wgf * mu_g - _dot_t(w1f, mu_i)  # (C1, 1)

    # ---- phase 1: compute z tiles, accumulate z statistics ---------------
    @pl.when(ph == 1)
    def _compute_pass():
        if use_stash:
            xi = x_buf[t].astype(jnp.float32)             # (in_ch, TS) from VMEM
            xg = xg_buf[t].astype(jnp.float32)            # (1, TS)
        else:
            xi = xin_ref[0].astype(jnp.float32)           # re-fetched from HBM
            xg = xg_ref[0].astype(jnp.float32)

        # conv1 (1x1x1): MXU with lane-dense RHS; gate channel via VPU broadcast.
        h = _dot_t(w1f_s[...], xi) + wgf_s[...] * xg + b1f_s[...]   # (C1, TS)
        # LeakyReLU(0.01)
        h = jnp.where(h >= 0, h, NEG_SLOPE * h)
        # conv2 (C1 -> 1): M=1 matmul is pure MXU padding, do it on VPU/XLU.
        z = jnp.sum(h * w2_ref[...], axis=0, keepdims=True) + b2_ref[0]  # (1, TS)

        # z statistics for the second InstanceNorm (per-tile partial means).
        zm = jnp.mean(z, axis=1, keepdims=True)           # (1, 1)
        dz = z - zm
        z_m[...] += zm
        z_msq[...] += zm * zm
        z_m2[...] += jnp.sum(dz * dz, axis=1, keepdims=True)

        z_buf[t] = z                                      # stash tile in VMEM

    # ---- phase 2 (once per sample): finalize z InstanceNorm ---------------
    @pl.when((ph == 2) & (t == 0))
    def _z_finalize():
        zmu = z_m[...] * inv_t
        zvar = z_m2[...] * inv_s + z_msq[...] * inv_t - zmu * zmu
        z_mu_s[...] = zmu
        z_zs_s[...] = jax.lax.rsqrt(zvar + EPS)

    # ---- phase 2: normalize z, sigmoid, lane-dense output ----------------
    @pl.when(ph == 2)
    def _output_pass():
        z = z_buf[t]                                      # (1, TS)
        o_ref[0] = jax.nn.sigmoid(
            (z - z_mu_s[...]) * z_zs_s[...]).astype(o_ref.dtype)


def _choose_spatial_tile(S, target):
    """Largest multiple of 128 that divides S and is <= target, else whole S."""
    if S <= target or S % 128 != 0:
        return S
    best = None
    ts = 128
    while ts <= target:
        if S % ts == 0:
            best = ts
        ts += 128
    return best if best is not None else S


def gate_spatial_conv3d_forward(input_features, gating_features, params, *,
                                tile_target=8192,
                                vmem_stash_budget=8 * 1024 * 1024):
    """input_features: (N, in_ch, D, H, W); gating_features: (N, 1, D, H, W)."""
    w1t, b1, w2t, b2 = params
    N, in_ch, D, H, W = input_features.shape
    C1 = in_ch + 1
    S = D * H * W

    # Free reshapes only -- no concat, no transpose, no dtype round trip.
    xin = input_features.reshape(N, in_ch, S)
    xg = gating_features.reshape(N, 1, S)

    TS = _choose_spatial_tile(S, tile_target)
    T = S // TS

    # Decide whether the raw activations of one sample fit in a VMEM stash
    # (sublane dims pad to 8). If yes, x is read from HBM only once per sample.
    itemsize = jnp.dtype(xin.dtype).itemsize
    pad8 = lambda c: -(-c // 8) * 8
    stash_bytes = (pad8(in_ch) + 8) * S * itemsize
    use_stash = stash_bytes <= vmem_stash_budget
    T_stash = T if use_stash else 1
    # TODO(synk): for very large volumes the per-sample z stash (T,1,TS) itself can
    # exceed VMEM; that case would need an extra HBM round trip for z.

    w1t = jnp.asarray(w1t, jnp.float32)                   # (C1_in, C1_out) == W1.T
    w1i = w1t[:in_ch, :]                                  # rows for the input channels
    w1g = jnp.transpose(w1t[in_ch:in_ch + 1, :])          # (C1_out, 1): gate column of W1
    b1c = jnp.asarray(b1, jnp.float32).reshape(C1, 1)
    w2c = jnp.asarray(w2t, jnp.float32).reshape(C1, 1)
    b2v = jnp.asarray(b2, jnp.float32).reshape(1)

    last_fetch_phase = 0 if use_stash else 1

    def act_map(n, ph, t):
        # Phases that never read x clamp to the previously fetched block so the
        # pipeline does not issue a redundant HBM fetch.
        return (n, 0, jnp.where(ph <= last_fetch_phase, t, T - 1))

    def out_map(n, ph, t):
        # Output tiles are only written in phase 2; keep the block index pinned
        # earlier so no unwritten block gets flushed.
        return (n, 0, jnp.where(ph < 2, 0, t))

    def wmap(n, ph, t):
        return (0, 0)

    kernel = functools.partial(_gate_kernel, n_tiles=T, use_stash=use_stash)

    out = pl.pallas_call(
        kernel,
        out_shape=jax.ShapeDtypeStruct((N, 1, S), jnp.float32),
        grid_spec=pltpu.PrefetchScalarGridSpec(
            num_scalar_prefetch=0,
            grid=(N, 3, T),
            in_specs=[
                pl.BlockSpec((1, in_ch, TS), act_map),    # input features tile
                pl.BlockSpec((1, 1, TS), act_map),        # gating features tile
                pl.BlockSpec((in_ch, C1), wmap),          # W1^T rows for input channels
                pl.BlockSpec((C1, 1), wmap),              # W1 column for the gate channel
                pl.BlockSpec((C1, 1), wmap),              # b1
                pl.BlockSpec((C1, 1), wmap),              # W2^T (C1 -> 1)
                pl.BlockSpec(memory_space=pltpu.MemorySpace.SMEM),  # b2 scalar
            ],
            out_specs=pl.BlockSpec((1, 1, TS), out_map),
            scratch_shapes=[
                pltpu.VMEM((in_ch, 1), jnp.float32),      # sum of tile means (inputs)
                pltpu.VMEM((in_ch, 1), jnp.float32),      # sum of tile means^2
                pltpu.VMEM((in_ch, 1), jnp.float32),      # sum of within-tile M2
                pltpu.VMEM((1, 1), jnp.float32),          # same, gate channel
                pltpu.VMEM((1, 1), jnp.float32),
                pltpu.VMEM((1, 1), jnp.float32),
                pltpu.VMEM((1, 1), jnp.float32),          # z stats
                pltpu.VMEM((1, 1), jnp.float32),
                pltpu.VMEM((1, 1), jnp.float32),
                pltpu.VMEM((in_ch, C1), jnp.float32),     # folded W1 rows (per sample)
                pltpu.VMEM((C1, 1), jnp.float32),         # folded gate column
                pltpu.VMEM((C1, 1), jnp.float32),         # folded bias
                pltpu.VMEM((1, 1), jnp.float32),          # z mean (finalized)
                pltpu.VMEM((1, 1), jnp.float32),          # z inv-std (finalized)
                pltpu.VMEM((T_stash, in_ch, TS), xin.dtype),  # per-sample x stash
                pltpu.VMEM((T_stash, 1, TS), xg.dtype),       # per-sample gate stash
                pltpu.VMEM((T, 1, TS), jnp.float32),      # per-sample z tiles
            ],
        ),
        compiler_params=pltpu.CompilerParams(
            dimension_semantics=("parallel", "arbitrary", "arbitrary")),
    )(xin, xg, w1i, w1g, b1c, w2c, b2v)

    return out.reshape(N, 1, D, H, W)


def _reference_forward(input_features, gating_features, params):
    """Pure-JAX reference mirroring the PyTorch module."""
    w1t, b1, w2t, b2 = params
    x = jnp.concatenate([input_features, gating_features], axis=1)   # (N, C1, D, H, W)
    N, C1, D, H, W = x.shape
    xf = x.reshape(N, C1, -1).astype(jnp.float32)
    mean = xf.mean(axis=2, keepdims=True)
    var = ((xf - mean) ** 2).mean(axis=2, keepdims=True)
    y = (xf - mean) / jnp.sqrt(var + EPS)                            # (N, C1, S)
    y = y.transpose(0, 2, 1)                                         # (N, S, C1)
    h = y @ w1t + b1[None, None, :]
    h = jnp.where(h >= 0, h, NEG_SLOPE * h)
    z = h @ w2t + b2[None, None, :]                                  # (N, S, 1)
    zm = z.mean(axis=1, keepdims=True)
    zv = ((z - zm) ** 2).mean(axis=1, keepdims=True)
    z = (z - zm) / jnp.sqrt(zv + EPS)
    a = jax.nn.sigmoid(z)
    return a[:, :, 0].reshape(N, 1, D, H, W)


def init_params(key, in_ch):
    """Deterministic synthetic parameters matching the module's __init__ shapes.

    gate_conv[1]: Conv3d(in_ch+1, in_ch+1, 1) -> weight (C1, C1), bias (C1,)
    gate_conv[3]: Conv3d(in_ch+1, 1, 1)       -> weight (1, C1),  bias (1,)
    (self.outconv is unused in forward, so it is not materialized.)
    """
    C1 = in_ch + 1
    k1, k2, k3, k4 = jax.random.split(key, 4)
    w1 = jax.random.normal(k1, (C1, C1), jnp.float32) * 0.2   # (out, in)
    b1 = jax.random.normal(k2, (C1,), jnp.float32) * 0.1
    w2 = jax.random.normal(k3, (1, C1), jnp.float32) * 0.2
    b2 = jax.random.normal(k4, (1,), jnp.float32) * 0.1
    # kernel consumes transposed weights: (in, out)
    return (w1.T, b1, w2.T, b2)


if __name__ == "__main__":
    key = jax.random.PRNGKey(0)

    # Case 1: whole sample fits in a single spatial tile (T == 1), stash path.
    k_in, k_gate, k_par, key = jax.random.split(key, 4)
    N, in_ch, D, H, W = 2, 4, 8, 8, 8
    inp = jax.random.normal(k_in, (N, in_ch, D, H, W), jnp.float32)
    gat = jax.random.normal(k_gate, (N, 1, D, H, W), jnp.float32)
    params = init_params(k_par, in_ch)
    out = jax.block_until_ready(gate_spatial_conv3d_forward(inp, gat, params))
    ref = _reference_forward(inp, gat, params)
    assert out.shape == (N, 1, D, H, W)
    assert jnp.max(jnp.abs(out - ref)) < 1e-4, "mismatch vs reference (case 1)"

    # Case 2: multiple spatial tiles per sample (phased/tiled path, stash on).
    k_in, k_gate, k_par = jax.random.split(key, 3)
    N, in_ch, D, H, W = 1, 3, 8, 16, 8          # S = 1024, TS = 256 -> T = 4
    inp2 = jax.random.normal(k_in, (N, in_ch, D, H, W), jnp.float32)
    gat2 = jax.random.normal(k_gate, (N, 1, D, H, W), jnp.float32)
    params2 = init_params(k_par, in_ch)
    out2 = jax.block_until_ready(
        gate_spatial_conv3d_forward(inp2, gat2, params2, tile_target=256))
    ref2 = _reference_forward(inp2, gat2, params2)
    assert out2.shape == (N, 1, D, H, W)
    assert jnp.max(jnp.abs(out2 - ref2)) < 1e-4, "mismatch vs reference (case 2)"

    # Case 3: same inputs with the VMEM stash disabled (HBM re-fetch fallback).
    out3 = jax.block_until_ready(
        gate_spatial_conv3d_forward(inp2, gat2, params2, tile_target=256,
                                    vmem_stash_budget=0))
    assert jnp.max(jnp.abs(out3 - ref2)) < 1e-4, "mismatch vs reference (case 3)"

    print("KERNEL_OK")
</pallas_src>

<mosaic_0001>
module attributes {stable_mosaic.version = 11 : i64} {
  func.func @_gate_kernel(%arg0: i32, %arg1: i32, %arg2: i32, %arg3: memref<1x4x512xf32, #tpu.memory_space<vmem>>, %arg4: memref<1x1x512xf32, #tpu.memory_space<vmem>>, %arg5: memref<4x5xf32, #tpu.memory_space<vmem>>, %arg6: memref<5x1xf32, #tpu.memory_space<vmem>>, %arg7: memref<5x1xf32, #tpu.memory_space<vmem>>, %arg8: memref<5x1xf32, #tpu.memory_space<vmem>>, %arg9: memref<1xf32, #tpu.memory_space<smem>>, %arg10: memref<1x1x512xf32, #tpu.memory_space<vmem>>, %arg11: memref<4x1xf32, #tpu.memory_space<vmem>>, %arg12: memref<4x1xf32, #tpu.memory_space<vmem>>, %arg13: memref<4x1xf32, #tpu.memory_space<vmem>>, %arg14: memref<1x1xf32, #tpu.memory_space<vmem>>, %arg15: memref<1x1xf32, #tpu.memory_space<vmem>>, %arg16: memref<1x1xf32, #tpu.memory_space<vmem>>, %arg17: memref<1x1xf32, #tpu.memory_space<vmem>>, %arg18: memref<1x1xf32, #tpu.memory_space<vmem>>, %arg19: memref<1x1xf32, #tpu.memory_space<vmem>>, %arg20: memref<4x5xf32, #tpu.memory_space<vmem>>, %arg21: memref<5x1xf32, #tpu.memory_space<vmem>>, %arg22: memref<5x1xf32, #tpu.memory_space<vmem>>, %arg23: memref<1x1xf32, #tpu.memory_space<vmem>>, %arg24: memref<1x1xf32, #tpu.memory_space<vmem>>, %arg25: memref<1x4x512xf32, #tpu.memory_space<vmem>>, %arg26: memref<1x1x512xf32, #tpu.memory_space<vmem>>, %arg27: memref<1x1x512xf32, #tpu.memory_space<vmem>>) attributes {dimension_semantics = [#tpu.dimension_semantics<parallel>, #tpu.dimension_semantics<arbitrary>, #tpu.dimension_semantics<arbitrary>], iteration_bounds = array<i64: 2, 3, 1>, scalar_prefetch = 0 : i64, scratch_operands = 17 : i64, tpu.core_type = #tpu.core_type<tc>, window_params = [{transform_indices = @transform_0, window_bounds = array<i64: 1, 4, 512>}, {transform_indices = @transform_1, window_bounds = array<i64: 1, 1, 512>}, {pipeline_mode = #tpu.pipeline_mode<synchronous>, transform_indices = @transform_2, window_bounds = array<i64: 4, 5>}, {pipeline_mode = #tpu.pipeline_mode<synchronous>, transform_indices = @transform_3, window_bounds = array<i64: 5, 1>}, {pipeline_mode = #tpu.pipeline_mode<synchronous>, transform_indices = @transform_4, window_bounds = array<i64: 5, 1>}, {pipeline_mode = #tpu.pipeline_mode<synchronous>, transform_indices = @transform_5, window_bounds = array<i64: 5, 1>}, {transform_indices = @transform_6, window_bounds = array<i64: 1>}, {transform_indices = @transform_7, window_bounds = array<i64: 1, 1, 512>}]} {
    %c0_i32 = arith.constant 0 : i32
    %0 = arith.cmpi eq, %arg1, %c0_i32 : i32
    %c0_i32_0 = arith.constant 0 : i32
    %1 = arith.cmpi eq, %arg2, %c0_i32_0 : i32
    %2 = arith.andi %0, %1 : i1
    %3 = arith.extui %2 : i1 to i32
    %c0_i32_1 = arith.constant 0 : i32
    %4 = arith.cmpi ne, %3, %c0_i32_1 : i32
    scf.if %4 {
      %cst = arith.constant 0.000000e+00 : f32
      %24 = vector.broadcast %cst : f32 to vector<4x1xf32>
      %c0 = arith.constant 0 : index
      %c0_12 = arith.constant 0 : index
      %25 = vector.load %arg11[%c0, %c0_12] : memref<4x1xf32, #tpu.memory_space<vmem>>, vector<4x1xf32>
      tpu.vector_store %arg11[%c0, %c0_12], %24 {strides = array<i32>} : memref<4x1xf32, #tpu.memory_space<vmem>>, vector<4x1xf32>,
      %cst_13 = arith.constant 0.000000e+00 : f32
      %26 = vector.broadcast %cst_13 : f32 to vector<4x1xf32>
      %c0_14 = arith.constant 0 : index
      %c0_15 = arith.constant 0 : index
      %27 = vector.load %arg12[%c0_14, %c0_15] : memref<4x1xf32, #tpu.memory_space<vmem>>, vector<4x1xf32>
      tpu.vector_store %arg12[%c0_14, %c0_15], %26 {strides = array<i32>} : memref<4x1xf32, #tpu.memory_space<vmem>>, vector<4x1xf32>,
      %cst_16 = arith.constant 0.000000e+00 : f32
      %28 = vector.broadcast %cst_16 : f32 to vector<4x1xf32>
      %c0_17 = arith.constant 0 : index
      %c0_18 = arith.constant 0 : index
      %29 = vector.load %arg13[%c0_17, %c0_18] : memref<4x1xf32, #tpu.memory_space<vmem>>, vector<4x1xf32>
      tpu.vector_store %arg13[%c0_17, %c0_18], %28 {strides = array<i32>} : memref<4x1xf32, #tpu.memory_space<vmem>>, vector<4x1xf32>,
      %cst_19 = arith.constant 0.000000e+00 : f32
      %30 = vector.broadcast %cst_19 : f32 to vector<1x1xf32>
      %c0_20 = arith.constant 0 : index
      %c0_21 = arith.constant 0 : index
      %31 = vector.load %arg14[%c0_20, %c0_21] : memref<1x1xf32, #tpu.memory_space<vmem>>, vector<1x1xf32>
      tpu.vector_store %arg14[%c0_20, %c0_21], %30 {strides = array<i32>} : memref<1x1xf32, #tpu.memory_space<vmem>>, vector<1x1xf32>,
      %cst_22 = arith.constant 0.000000e+00 : f32
      %32 = vector.broadcast %cst_22 : f32 to vector<1x1xf32>
      %c0_23 = arith.constant 0 : index
      %c0_24 = arith.constant 0 : index
      %33 = vector.load %arg15[%c0_23, %c0_24] : memref<1x1xf32, #tpu.memory_space<vmem>>, vector<1x1xf32>
      tpu.vector_store %arg15[%c0_23, %c0_24], %32 {strides = array<i32>} : memref<1x1xf32, #tpu.memory_space<vmem>>, vector<1x1xf32>,
      %cst_25 = arith.constant 0.000000e+00 : f32
      %34 = vector.broadcast %cst_25 : f32 to vector<1x1xf32>
      %c0_26 = arith.constant 0 : index
      %c0_27 = arith.constant 0 : index
      %35 = vector.load %arg16[%c0_26, %c0_27] : memref<1x1xf32, #tpu.memory_space<vmem>>, vector<1x1xf32>
      tpu.vector_store %arg16[%c0_26, %c0_27], %34 {strides = array<i32>} : memref<1x1xf32, #tpu.memory_space<vmem>>, vector<1x1xf32>,
      %cst_28 = arith.constant 0.000000e+00 : f32
      %36 = vector.broadcast %cst_28 : f32 to vector<1x1xf32>
      %c0_29 = arith.constant 0 : index
      %c0_30 = arith.constant 0 : index
      %37 = vector.load %arg17[%c0_29, %c0_30] : memref<1x1xf32, #tpu.memory_space<vmem>>, vector<1x1xf32>
      tpu.vector_store %arg17[%c0_29, %c0_30], %36 {strides = array<i32>} : memref<1x1xf32, #tpu.memory_space<vmem>>, vector<1x1xf32>,
      %cst_31 = arith.constant 0.000000e+00 : f32
      %38 = vector.broadcast %cst_31 : f32 to vector<1x1xf32>
      %c0_32 = arith.constant 0 : index
      %c0_33 = arith.constant 0 : index
      %39 = vector.load %arg18[%c0_32, %c0_33] : memref<1x1xf32, #tpu.memory_space<vmem>>, vector<1x1xf32>
      tpu.vector_store %arg18[%c0_32, %c0_33], %38 {strides = array<i32>} : memref<1x1xf32, #tpu.memory_space<vmem>>, vector<1x1xf32>,
      %cst_34 = arith.constant 0.000000e+00 : f32
      %40 = vector.broadcast %cst_34 : f32 to vector<1x1xf32>
      %c0_35 = arith.constant 0 : index
      %c0_36 = arith.constant 0 : index
      %41 = vector.load %arg19[%c0_35, %c0_36] : memref<1x1xf32, #tpu.memory_space<vmem>>, vector<1x1xf32>
      tpu.vector_store %arg19[%c0_35, %c0_36], %40 {strides = array<i32>} : memref<1x1xf32, #tpu.memory_space<vmem>>, vector<1x1xf32>,
    } else {
    }
    %c0_i32_2 = arith.constant 0 : i32
    %5 = arith.cmpi eq, %arg1, %c0_i32_2 : i32
    %6 = arith.extui %5 : i1 to i32
    %c0_i32_3 = arith.constant 0 : i32
    %7 = arith.cmpi ne, %6, %c0_i32_3 : i32
    scf.if %7 {
      %c0 = arith.constant 0 : index
      %c0_12 = arith.constant 0 : index
      %c0_13 = arith.constant 0 : index
      %24 = vector.load %arg3[%c0, %c0_12, %c0_13] : memref<1x4x512xf32, #tpu.memory_space<vmem>>, vector<1x4x512xf32>
      %25 = vector.shape_cast %24 : vector<1x4x512xf32> to vector<4x512xf32>
      %c0_14 = arith.constant 0 : index
      %c0_15 = arith.constant 0 : index
      %c0_16 = arith.constant 0 : index
      %26 = vector.load %arg4[%c0_14, %c0_15, %c0_16] : memref<1x1x512xf32, #tpu.memory_space<vmem>>, vector<1x1x512xf32>
      %27 = vector.shape_cast %26 : vector<1x1x512xf32> to vector<1x512xf32>
      %28 = arith.index_cast %arg2 : i32 to index
      %c0_17 = arith.constant 0 : index
      %c0_18 = arith.constant 0 : index
      %29 = vector.load %arg25[%28, %c0_17, %c0_18] : memref<1x4x512xf32, #tpu.memory_space<vmem>>, vector<1x4x512xf32>
      %30 = vector.shape_cast %29 : vector<1x4x512xf32> to vector<4x512xf32>
      %31 = vector.shape_cast %25 : vector<4x512xf32> to vector<1x4x512xf32>
      tpu.vector_store %arg25[%28, %c0_17, %c0_18], %31 {strides = array<i32>} : memref<1x4x512xf32, #tpu.memory_space<vmem>>, vector<1x4x512xf32>,
      %32 = arith.index_cast %arg2 : i32 to index
      %c0_19 = arith.constant 0 : index
      %c0_20 = arith.constant 0 : index
      %33 = vector.load %arg26[%32, %c0_19, %c0_20] : memref<1x1x512xf32, #tpu.memory_space<vmem>>, vector<1x1x512xf32>
      %34 = vector.shape_cast %33 : vector<1x1x512xf32> to vector<1x512xf32>
      %35 = vector.shape_cast %27 : vector<1x512xf32> to vector<1x1x512xf32>
      tpu.vector_store %arg26[%32, %c0_19, %c0_20], %35 {strides = array<i32>} : memref<1x1x512xf32, #tpu.memory_space<vmem>>, vector<1x1x512xf32>,
      %cst = arith.constant dense<0.000000e+00> : vector<4xf32>
      %36 = vector.multi_reduction <add>, %25, %cst [1] : vector<4x512xf32> to vector<4xf32>
      %37 = vector.shape_cast %36 : vector<4xf32> to vector<4x1xf32>
      %cst_21 = arith.constant 5.120000e+02 : f32
      %38 = vector.broadcast %cst_21 : f32 to vector<4x1xf32>
      %39 = arith.divf %37, %38 : vector<4x1xf32>
      %cst_22 = arith.constant dense<0.000000e+00> : vector<1xf32>
      %40 = vector.multi_reduction <add>, %27, %cst_22 [1] : vector<1x512xf32> to vector<1xf32>
      %41 = vector.shape_cast %40 : vector<1xf32> to vector<1x1xf32>
      %cst_23 = arith.constant 5.120000e+02 : f32
      %42 = vector.broadcast %cst_23 : f32 to vector<1x1xf32>
      %43 = arith.divf %41, %42 : vector<1x1xf32>
      %44 = vector.broadcast %39 : vector<4x1xf32> to vector<4x512xf32>
      %45 = arith.subf %25, %44 : vector<4x512xf32>
      %46 = vector.broadcast %43 : vector<1x1xf32> to vector<1x512xf32>
      %47 = arith.subf %27, %46 : vector<1x512xf32>
      %c0_24 = arith.constant 0 : index
      %c0_25 = arith.constant 0 : index
      %48 = vector.load %arg11[%c0_24, %c0_25] : memref<4x1xf32, #tpu.memory_space<vmem>>, vector<4x1xf32>
      %49 = arith.addf %48, %39 : vector<4x1xf32>
      %c0_26 = arith.constant 0 : index
      %c0_27 = arith.constant 0 : index
      %50 = vector.load %arg11[%c0_26, %c0_27] : memref<4x1xf32, #tpu.memory_space<vmem>>, vector<4x1xf32>
      tpu.vector_store %arg11[%c0_26, %c0_27], %49 {strides = array<i32>} : memref<4x1xf32, #tpu.memory_space<vmem>>, vector<4x1xf32>,
      %c0_28 = arith.constant 0 : index
      %c0_29 = arith.constant 0 : index
      %51 = vector.load %arg12[%c0_28, %c0_29] : memref<4x1xf32, #tpu.memory_space<vmem>>, vector<4x1xf32>
      %52 = arith.mulf %39, %39 : vector<4x1xf32>
      %53 = arith.addf %51, %52 : vector<4x1xf32>
      %c0_30 = arith.constant 0 : index
      %c0_31 = arith.constant 0 : index
      %54 = vector.load %arg12[%c0_30, %c0_31] : memref<4x1xf32, #tpu.memory_space<vmem>>, vector<4x1xf32>
      tpu.vector_store %arg12[%c0_30, %c0_31], %53 {strides = array<i32>} : memref<4x1xf32, #tpu.memory_space<vmem>>, vector<4x1xf32>,
      %c0_32 = arith.constant 0 : index
      %c0_33 = arith.constant 0 : index
      %55 = vector.load %arg13[%c0_32, %c0_33] : memref<4x1xf32, #tpu.memory_space<vmem>>, vector<4x1xf32>
      %56 = arith.mulf %45, %45 : vector<4x512xf32>
      %cst_34 = arith.constant dense<0.000000e+00> : vector<4xf32>
      %57 = vector.multi_reduction <add>, %56, %cst_34 [1] : vector<4x512xf32> to vector<4xf32>
      %58 = vector.shape_cast %57 : vector<4xf32> to vector<4x1xf32>
      %59 = arith.addf %55, %58 : vector<4x1xf32>
      %c0_35 = arith.constant 0 : index
      %c0_36 = arith.constant 0 : index
      %60 = vector.load %arg13[%c0_35, %c0_36] : memref<4x1xf32, #tpu.memory_space<vmem>>, vector<4x1xf32>
      tpu.vector_store %arg13[%c0_35, %c0_36], %59 {strides = array<i32>} : memref<4x1xf32, #tpu.memory_space<vmem>>, vector<4x1xf32>,
      %c0_37 = arith.constant 0 : index
      %c0_38 = arith.constant 0 : index
      %61 = vector.load %arg14[%c0_37, %c0_38] : memref<1x1xf32, #tpu.memory_space<vmem>>, vector<1x1xf32>
      %62 = arith.addf %61, %43 : vector<1x1xf32>
      %c0_39 = arith.constant 0 : index
      %c0_40 = arith.constant 0 : index
      %63 = vector.load %arg14[%c0_39, %c0_40] : memref<1x1xf32, #tpu.memory_space<vmem>>, vector<1x1xf32>
      tpu.vector_store %arg14[%c0_39, %c0_40], %62 {strides = array<i32>} : memref<1x1xf32, #tpu.memory_space<vmem>>, vector<1x1xf32>,
      %c0_41 = arith.constant 0 : index
      %c0_42 = arith.constant 0 : index
      %64 = vector.load %arg15[%c0_41, %c0_42] : memref<1x1xf32, #tpu.memory_space<vmem>>, vector<1x1xf32>
      %65 = arith.mulf %43, %43 : vector<1x1xf32>
      %66 = arith.addf %64, %65 : vector<1x1xf32>
      %c0_43 = arith.constant 0 : index
      %c0_44 = arith.constant 0 : index
      %67 = vector.load %arg15[%c0_43, %c0_44] : memref<1x1xf32, #tpu.memory_space<vmem>>, vector<1x1xf32>
      tpu.vector_store %arg15[%c0_43, %c0_44], %66 {strides = array<i32>} : memref<1x1xf32, #tpu.memory_space<vmem>>, vector<1x1xf32>,
      %c0_45 = arith.constant 0 : index
      %c0_46 = arith.constant 0 : index
      %68 = vector.load %arg16[%c0_45, %c0_46] : memref<1x1xf32, #tpu.memory_space<vmem>>, vector<1x1xf32>
      %69 = arith.mulf %47, %47 : vector<1x512xf32>
      %cst_47 = arith.constant dense<0.000000e+00> : vector<1xf32>
      %70 = vector.multi_reduction <add>, %69, %cst_47 [1] : vector<1x512xf32> to vector<1xf32>
      %71 = vector.shape_cast %70 : vector<1xf32> to vector<1x1xf32>
      %72 = arith.addf %68, %71 : vector<1x1xf32>
      %c0_48 = arith.constant 0 : index
      %c0_49 = arith.constant 0 : index
      %73 = vector.load %arg16[%c0_48, %c0_49] : memref<1x1xf32, #tpu.memory_space<vmem>>, vector<1x1xf32>
      tpu.vector_store %arg16[%c0_48, %c0_49], %72 {strides = array<i32>} : memref<1x1xf32, #tpu.memory_space<vmem>>, vector<1x1xf32>,
    } else {
    }
    %c1_i32 = arith.constant 1 : i32
    %8 = arith.cmpi eq, %arg1, %c1_i32 : i32
    %c0_i32_4 = arith.constant 0 : i32
    %9 = arith.cmpi eq, %arg2, %c0_i32_4 : i32
    %10 = arith.andi %8, %9 : i1
    %11 = arith.extui %10 : i1 to i32
    %c0_i32_5 = arith.constant 0 : i32
    %12 = arith.cmpi ne, %11, %c0_i32_5 : i32
    scf.if %12 {
      %c0 = arith.constant 0 : index
      %c0_12 = arith.constant 0 : index
      %24 = vector.load %arg11[%c0, %c0_12] : memref<4x1xf32, #tpu.memory_space<vmem>>, vector<4x1xf32>
      %cst = arith.constant 1.000000e+00 : f32
      %25 = vector.broadcast %cst : f32 to vector<4x1xf32>
      %26 = arith.mulf %24, %25 : vector<4x1xf32>
      %c0_13 = arith.constant 0 : index
      %c0_14 = arith.constant 0 : index
      %27 = vector.load %arg13[%c0_13, %c0_14] : memref<4x1xf32, #tpu.memory_space<vmem>>, vector<4x1xf32>
      %cst_15 = arith.constant 0.001953125 : f32
      %28 = vector.broadcast %cst_15 : f32 to vector<4x1xf32>
      %29 = arith.mulf %27, %28 : vector<4x1xf32>
      %c0_16 = arith.constant 0 : index
      %c0_17 = arith.constant 0 : index
      %30 = vector.load %arg12[%c0_16, %c0_17] : memref<4x1xf32, #tpu.memory_space<vmem>>, vector<4x1xf32>
      %cst_18 = arith.constant 1.000000e+00 : f32
      %31 = vector.broadcast %cst_18 : f32 to vector<4x1xf32>
      %32 = arith.mulf %30, %31 : vector<4x1xf32>
      %33 = arith.addf %29, %32 : vector<4x1xf32>
      %34 = arith.mulf %26, %26 : vector<4x1xf32>
      %35 = arith.subf %33, %34 : vector<4x1xf32>
      %cst_19 = arith.constant 9.99999974E-6 : f32
      %36 = vector.broadcast %cst_19 : f32 to vector<4x1xf32>
      %37 = arith.addf %35, %36 : vector<4x1xf32>
      %38 = math.rsqrt %37 : vector<4x1xf32>
      %c0_20 = arith.constant 0 : index
      %c0_21 = arith.constant 0 : index
      %39 = vector.load %arg14[%c0_20, %c0_21] : memref<1x1xf32, #tpu.memory_space<vmem>>, vector<1x1xf32>
      %cst_22 = arith.constant 1.000000e+00 : f32
      %40 = vector.broadcast %cst_22 : f32 to vector<1x1xf32>
      %41 = arith.mulf %39, %40 : vector<1x1xf32>
      %c0_23 = arith.constant 0 : index
      %c0_24 = arith.constant 0 : index
      %42 = vector.load %arg16[%c0_23, %c0_24] : memref<1x1xf32, #tpu.memory_space<vmem>>, vector<1x1xf32>
      %cst_25 = arith.constant 0.001953125 : f32
      %43 = vector.broadcast %cst_25 : f32 to vector<1x1xf32>
      %44 = arith.mulf %42, %43 : vector<1x1xf32>
      %c0_26 = arith.constant 0 : index
      %c0_27 = arith.constant 0 : index
      %45 = vector.load %arg15[%c0_26, %c0_27] : memref<1x1xf32, #tpu.memory_space<vmem>>, vector<1x1xf32>
      %cst_28 = arith.constant 1.000000e+00 : f32
      %46 = vector.broadcast %cst_28 : f32 to vector<1x1xf32>
      %47 = arith.mulf %45, %46 : vector<1x1xf32>
      %48 = arith.addf %44, %47 : vector<1x1xf32>
      %49 = arith.mulf %41, %41 : vector<1x1xf32>
      %50 = arith.subf %48, %49 : vector<1x1xf32>
      %cst_29 = arith.constant 9.99999974E-6 : f32
      %51 = vector.broadcast %cst_29 : f32 to vector<1x1xf32>
      %52 = arith.addf %50, %51 : vector<1x1xf32>
      %53 = math.rsqrt %52 : vector<1x1xf32>
      %c0_30 = arith.constant 0 : index
      %c0_31 = arith.constant 0 : index
      %54 = vector.load %arg5[%c0_30, %c0_31] : memref<4x5xf32, #tpu.memory_space<vmem>>, vector<4x5xf32>
      %55 = vector.broadcast %38 : vector<4x1xf32> to vector<4x5xf32>
      %56 = arith.mulf %54, %55 : vector<4x5xf32>
      %c0_32 = arith.constant 0 : index
      %c0_33 = arith.constant 0 : index
      %57 = vector.load %arg6[%c0_32, %c0_33] : memref<5x1xf32, #tpu.memory_space<vmem>>, vector<5x1xf32>
      %58 = vector.broadcast %53 : vector<1x1xf32> to vector<5x1xf32>
      %59 = arith.mulf %57, %58 : vector<5x1xf32>
      %c0_34 = arith.constant 0 : index
      %c0_35 = arith.constant 0 : index
      %60 = vector.load %arg20[%c0_34, %c0_35] : memref<4x5xf32, #tpu.memory_space<vmem>>, vector<4x5xf32>
      tpu.vector_store %arg20[%c0_34, %c0_35], %56 {strides = array<i32>} : memref<4x5xf32, #tpu.memory_space<vmem>>, vector<4x5xf32>,
      %c0_36 = arith.constant 0 : index
      %c0_37 = arith.constant 0 : index
      %61 = vector.load %arg21[%c0_36, %c0_37] : memref<5x1xf32, #tpu.memory_space<vmem>>, vector<5x1xf32>
      tpu.vector_store %arg21[%c0_36, %c0_37], %59 {strides = array<i32>} : memref<5x1xf32, #tpu.memory_space<vmem>>, vector<5x1xf32>,
      %c0_38 = arith.constant 0 : index
      %c0_39 = arith.constant 0 : index
      %62 = vector.load %arg7[%c0_38, %c0_39] : memref<5x1xf32, #tpu.memory_space<vmem>>, vector<5x1xf32>
      %63 = vector.broadcast %41 : vector<1x1xf32> to vector<5x1xf32>
      %64 = arith.mulf %59, %63 : vector<5x1xf32>
      %65 = arith.subf %62, %64 : vector<5x1xf32>
      %cst_40 = arith.constant dense<0.000000e+00> : vector<5x1xf32>
      %66 = tpu.matmul %56, %26, %cst_40 {dimension_numbers = #tpu.dot_dimension_numbers<[0], [0], [1], [1], [0, 1, 1, 1], [], []>} : vector<4x5xf32>, vector<4x1xf32>, vector<5x1xf32> -> vector<5x1xf32>
      %67 = arith.subf %65, %66 : vector<5x1xf32>
      %c0_41 = arith.constant 0 : index
      %c0_42 = arith.constant 0 : index
      %68 = vector.load %arg22[%c0_41, %c0_42] : memref<5x1xf32, #tpu.memory_space<vmem>>, vector<5x1xf32>
      tpu.vector_store %arg22[%c0_41, %c0_42], %67 {strides = array<i32>} : memref<5x1xf32, #tpu.memory_space<vmem>>, vector<5x1xf32>,
    } else {
    }
    %c1_i32_6 = arith.constant 1 : i32
    %13 = arith.cmpi eq, %arg1, %c1_i32_6 : i32
    %14 = arith.extui %13 : i1 to i32
    %c0_i32_7 = arith.constant 0 : i32
    %15 = arith.cmpi ne, %14, %c0_i32_7 : i32
    scf.if %15 {
      %24 = arith.index_cast %arg2 : i32 to index
      %c0 = arith.constant 0 : index
      %c0_12 = arith.constant 0 : index
      %25 = vector.load %arg25[%24, %c0, %c0_12] : memref<1x4x512xf32, #tpu.memory_space<vmem>>, vector<1x4x512xf32>
      %26 = vector.shape_cast %25 : vector<1x4x512xf32> to vector<4x512xf32>
      %27 = arith.index_cast %arg2 : i32 to index
      %c0_13 = arith.constant 0 : index
      %c0_14 = arith.constant 0 : index
      %28 = vector.load %arg26[%27, %c0_13, %c0_14] : memref<1x1x512xf32, #tpu.memory_space<vmem>>, vector<1x1x512xf32>
      %29 = vector.shape_cast %28 : vector<1x1x512xf32> to vector<1x512xf32>
      %c0_15 = arith.constant 0 : index
      %c0_16 = arith.constant 0 : index
      %30 = vector.load %arg20[%c0_15, %c0_16] : memref<4x5xf32, #tpu.memory_space<vmem>>, vector<4x5xf32>
      %cst = arith.constant dense<0.000000e+00> : vector<5x512xf32>
      %31 = tpu.matmul %30, %26, %cst {dimension_numbers = #tpu.dot_dimension_numbers<[0], [0], [1], [1], [0, 1, 1, 1], [], []>} : vector<4x5xf32>, vector<4x512xf32>, vector<5x512xf32> -> vector<5x512xf32>
      %c0_17 = arith.constant 0 : index
      %c0_18 = arith.constant 0 : index
      %32 = vector.load %arg21[%c0_17, %c0_18] : memref<5x1xf32, #tpu.memory_space<vmem>>, vector<5x1xf32>
      %33 = vector.broadcast %32 : vector<5x1xf32> to vector<5x512xf32>
      %34 = vector.broadcast %29 : vector<1x512xf32> to vector<5x512xf32>
      %35 = arith.mulf %33, %34 : vector<5x512xf32>
      %36 = arith.addf %31, %35 : vector<5x512xf32>
      %c0_19 = arith.constant 0 : index
      %c0_20 = arith.constant 0 : index
      %37 = vector.load %arg22[%c0_19, %c0_20] : memref<5x1xf32, #tpu.memory_space<vmem>>, vector<5x1xf32>
      %38 = vector.broadcast %37 : vector<5x1xf32> to vector<5x512xf32>
      %39 = arith.addf %36, %38 : vector<5x512xf32>
      %cst_21 = arith.constant 0.000000e+00 : f32
      %40 = vector.broadcast %cst_21 : f32 to vector<5x512xf32>
      %41 = arith.cmpf oge, %39, %40 : vector<5x512xf32>
      %cst_22 = arith.constant 0.00999999977 : f32
      %42 = vector.broadcast %cst_22 : f32 to vector<5x512xf32>
      %43 = arith.mulf %42, %39 : vector<5x512xf32>
      %44 = arith.select %41, %39, %43 : vector<5x512xi1>, vector<5x512xf32>
      %c0_23 = arith.constant 0 : index
      %c0_24 = arith.constant 0 : index
      %45 = vector.load %arg8[%c0_23, %c0_24] : memref<5x1xf32, #tpu.memory_space<vmem>>, vector<5x1xf32>
      %46 = vector.broadcast %45 : vector<5x1xf32> to vector<5x512xf32>
      %47 = arith.mulf %44, %46 : vector<5x512xf32>
      %cst_25 = arith.constant dense<0.000000e+00> : vector<512xf32>
      %48 = vector.multi_reduction <add>, %47, %cst_25 [0] : vector<5x512xf32> to vector<512xf32>
      %49 = vector.shape_cast %48 : vector<512xf32> to vector<1x512xf32>
      %c0_26 = arith.constant 0 : index
      %50 = memref.load %arg9[%c0_26] : memref<1xf32, #tpu.memory_space<smem>>
      %51 = vector.broadcast %50 : f32 to vector<1x512xf32>
      %52 = arith.addf %49, %51 : vector<1x512xf32>
      %cst_27 = arith.constant dense<0.000000e+00> : vector<1xf32>
      %53 = vector.multi_reduction <add>, %52, %cst_27 [1] : vector<1x512xf32> to vector<1xf32>
      %54 = vector.shape_cast %53 : vector<1xf32> to vector<1x1xf32>
      %cst_28 = arith.constant 5.120000e+02 : f32
      %55 = vector.broadcast %cst_28 : f32 to vector<1x1xf32>
      %56 = arith.divf %54, %55 : vector<1x1xf32>
      %57 = vector.broadcast %56 : vector<1x1xf32> to vector<1x512xf32>
      %58 = arith.subf %52, %57 : vector<1x512xf32>
      %c0_29 = arith.constant 0 : index
      %c0_30 = arith.constant 0 : index
      %59 = vector.load %arg17[%c0_29, %c0_30] : memref<1x1xf32, #tpu.memory_space<vmem>>, vector<1x1xf32>
      %60 = arith.addf %59, %56 : vector<1x1xf32>
      %c0_31 = arith.constant 0 : index
      %c0_32 = arith.constant 0 : index
      %61 = vector.load %arg17[%c0_31, %c0_32] : memref<1x1xf32, #tpu.memory_space<vmem>>, vector<1x1xf32>
      tpu.vector_store %arg17[%c0_31, %c0_32], %60 {strides = array<i32>} : memref<1x1xf32, #tpu.memory_space<vmem>>, vector<1x1xf32>,
      %c0_33 = arith.constant 0 : index
      %c0_34 = arith.constant 0 : index
      %62 = vector.load %arg18[%c0_33, %c0_34] : memref<1x1xf32, #tpu.memory_space<vmem>>, vector<1x1xf32>
      %63 = arith.mulf %56, %56 : vector<1x1xf32>
      %64 = arith.addf %62, %63 : vector<1x1xf32>
      %c0_35 = arith.constant 0 : index
      %c0_36 = arith.constant 0 : index
      %65 = vector.load %arg18[%c0_35, %c0_36] : memref<1x1xf32, #tpu.memory_space<vmem>>, vector<1x1xf32>
      tpu.vector_store %arg18[%c0_35, %c0_36], %64 {strides = array<i32>} : memref<1x1xf32, #tpu.memory_space<vmem>>, vector<1x1xf32>,
      %c0_37 = arith.constant 0 : index
      %c0_38 = arith.constant 0 : index
      %66 = vector.load %arg19[%c0_37, %c0_38] : memref<1x1xf32, #tpu.memory_space<vmem>>, vector<1x1xf32>
      %67 = arith.mulf %58, %58 : vector<1x512xf32>
      %cst_39 = arith.constant dense<0.000000e+00> : vector<1xf32>
      %68 = vector.multi_reduction <add>, %67, %cst_39 [1] : vector<1x512xf32> to vector<1xf32>
      %69 = vector.shape_cast %68 : vector<1xf32> to vector<1x1xf32>
      %70 = arith.addf %66, %69 : vector<1x1xf32>
      %c0_40 = arith.constant 0 : index
      %c0_41 = arith.constant 0 : index
      %71 = vector.load %arg19[%c0_40, %c0_41] : memref<1x1xf32, #tpu.memory_space<vmem>>, vector<1x1xf32>
      tpu.vector_store %arg19[%c0_40, %c0_41], %70 {strides = array<i32>} : memref<1x1xf32, #tpu.memory_space<vmem>>, vector<1x1xf32>,
      %72 = arith.index_cast %arg2 : i32 to index
      %c0_42 = arith.constant 0 : index
      %c0_43 = arith.constant 0 : index
      %73 = vector.load %arg27[%72, %c0_42, %c0_43] : memref<1x1x512xf32, #tpu.memory_space<vmem>>, vector<1x1x512xf32>
      %74 = vector.shape_cast %73 : vector<1x1x512xf32> to vector<1x512xf32>
      %75 = vector.shape_cast %52 : vector<1x512xf32> to vector<1x1x512xf32>
      tpu.vector_store %arg27[%72, %c0_42, %c0_43], %75 {strides = array<i32>} : memref<1x1x512xf32, #tpu.memory_space<vmem>>, vector<1x1x512xf32>,
    } else {
    }
    %c2_i32 = arith.constant 2 : i32
    %16 = arith.cmpi eq, %arg1, %c2_i32 : i32
    %c0_i32_8 = arith.constant 0 : i32
    %17 = arith.cmpi eq, %arg2, %c0_i32_8 : i32
    %18 = arith.andi %16, %17 : i1
    %19 = arith.extui %18 : i1 to i32
    %c0_i32_9 = arith.constant 0 : i32
    %20 = arith.cmpi ne, %19, %c0_i32_9 : i32
    scf.if %20 {
      %c0 = arith.constant 0 : index
      %c0_12 = arith.constant 0 : index
      %24 = vector.load %arg17[%c0, %c0_12] : memref<1x1xf32, #tpu.memory_space<vmem>>, vector<1x1xf32>
      %cst = arith.constant 1.000000e+00 : f32
      %25 = vector.broadcast %cst : f32 to vector<1x1xf32>
      %26 = arith.mulf %24, %25 : vector<1x1xf32>
      %c0_13 = arith.constant 0 : index
      %c0_14 = arith.constant 0 : index
      %27 = vector.load %arg19[%c0_13, %c0_14] : memref<1x1xf32, #tpu.memory_space<vmem>>, vector<1x1xf32>
      %cst_15 = arith.constant 0.001953125 : f32
      %28 = vector.broadcast %cst_15 : f32 to vector<1x1xf32>
      %29 = arith.mulf %27, %28 : vector<1x1xf32>
      %c0_16 = arith.constant 0 : index
      %c0_17 = arith.constant 0 : index
      %30 = vector.load %arg18[%c0_16, %c0_17] : memref<1x1xf32, #tpu.memory_space<vmem>>, vector<1x1xf32>
      %cst_18 = arith.constant 1.000000e+00 : f32
      %31 = vector.broadcast %cst_18 : f32 to vector<1x1xf32>
      %32 = arith.mulf %30, %31 : vector<1x1xf32>
      %33 = arith.addf %29, %32 : vector<1x1xf32>
      %34 = arith.mulf %26, %26 : vector<1x1xf32>
      %35 = arith.subf %33, %34 : vector<1x1xf32>
      %c0_19 = arith.constant 0 : index
      %c0_20 = arith.constant 0 : index
      %36 = vector.load %arg23[%c0_19, %c0_20] : memref<1x1xf32, #tpu.memory_space<vmem>>, vector<1x1xf32>
      tpu.vector_store %arg23[%c0_19, %c0_20], %26 {strides = array<i32>} : memref<1x1xf32, #tpu.memory_space<vmem>>, vector<1x1xf32>,
      %cst_21 = arith.constant 9.99999974E-6 : f32
      %37 = vector.broadcast %cst_21 : f32 to vector<1x1xf32>
      %38 = arith.addf %35, %37 : vector<1x1xf32>
      %39 = math.rsqrt %38 : vector<1x1xf32>
      %c0_22 = arith.constant 0 : index
      %c0_23 = arith.constant 0 : index
      %40 = vector.load %arg24[%c0_22, %c0_23] : memref<1x1xf32, #tpu.memory_space<vmem>>, vector<1x1xf32>
      tpu.vector_store %arg24[%c0_22, %c0_23], %39 {strides = array<i32>} : memref<1x1xf32, #tpu.memory_space<vmem>>, vector<1x1xf32>,
    } else {
    }
    %c2_i32_10 = arith.constant 2 : i32
    %21 = arith.cmpi eq, %arg1, %c2_i32_10 : i32
    %22 = arith.extui %21 : i1 to i32
    %c0_i32_11 = arith.constant 0 : i32
    %23 = arith.cmpi ne, %22, %c0_i32_11 : i32
    scf.if %23 {
      %24 = arith.index_cast %arg2 : i32 to index
      %c0 = arith.constant 0 : index
      %c0_12 = arith.constant 0 : index
      %25 = vector.load %arg27[%24, %c0, %c0_12] : memref<1x1x512xf32, #tpu.memory_space<vmem>>, vector<1x1x512xf32>
      %26 = vector.shape_cast %25 : vector<1x1x512xf32> to vector<1x512xf32>
      %c0_13 = arith.constant 0 : index
      %c0_14 = arith.constant 0 : index
      %27 = vector.load %arg23[%c0_13, %c0_14] : memref<1x1xf32, #tpu.memory_space<vmem>>, vector<1x1xf32>
      %28 = vector.broadcast %27 : vector<1x1xf32> to vector<1x512xf32>
      %29 = arith.subf %26, %28 : vector<1x512xf32>
      %c0_15 = arith.constant 0 : index
      %c0_16 = arith.constant 0 : index
      %30 = vector.load %arg24[%c0_15, %c0_16] : memref<1x1xf32, #tpu.memory_space<vmem>>, vector<1x1xf32>
      %31 = vector.broadcast %30 : vector<1x1xf32> to vector<1x512xf32>
      %32 = arith.mulf %29, %31 : vector<1x512xf32>
      %33 = arith.negf %32 : vector<1x512xf32>
      %34 = math.exp %33 : vector<1x512xf32>
      %cst = arith.constant 1.000000e+00 : f32
      %35 = vector.broadcast %cst : f32 to vector<1x512xf32>
      %36 = arith.addf %35, %34 : vector<1x512xf32>
      %37 = arith.divf %35, %36 : vector<1x512xf32>
      %c0_17 = arith.constant 0 : index
      %c0_18 = arith.constant 0 : index
      %c0_19 = arith.constant 0 : index
      %38 = vector.load %arg10[%c0_17, %c0_18, %c0_19] : memref<1x1x512xf32, #tpu.memory_space<vmem>>, vector<1x1x512xf32>
      %39 = vector.shape_cast %38 : vector<1x1x512xf32> to vector<1x512xf32>
      %40 = vector.shape_cast %37 : vector<1x512xf32> to vector<1x1x512xf32>
      tpu.vector_store %arg10[%c0_17, %c0_18, %c0_19], %40 {strides = array<i32>} : memref<1x1x512xf32, #tpu.memory_space<vmem>>, vector<1x1x512xf32>,
    } else {
    }
    return
  }
  func.func @transform_0(%arg0: i32, %arg1: i32, %arg2: i32) -> (i32, i32, i32) {
    %c0_i32 = arith.constant 0 : i32
    %0 = arith.cmpi sle, %arg1, %c0_i32 : i32
    %c0_i32_0 = arith.constant 0 : i32
    %1 = arith.select %0, %arg2, %c0_i32_0 : i32
    %c0_i32_1 = arith.constant 0 : i32
    %c0_i32_2 = arith.constant 0 : i32
    return %arg0, %c0_i32_1, %1 : i32, i32, i32
  }
  func.func @transform_1(%arg0: i32, %arg1: i32, %arg2: i32) -> (i32, i32, i32) {
    %c0_i32 = arith.constant 0 : i32
    %0 = arith.cmpi sle, %arg1, %c0_i32 : i32
    %c0_i32_0 = arith.constant 0 : i32
    %1 = arith.select %0, %arg2, %c0_i32_0 : i32
    %c0_i32_1 = arith.constant 0 : i32
    %c0_i32_2 = arith.constant 0 : i32
    return %arg0, %c0_i32_1, %1 : i32, i32, i32
  }
  func.func @transform_2(%arg0: i32, %arg1: i32, %arg2: i32) -> (i32, i32) {
    %c0_i32 = arith.constant 0 : i32
    %c0_i32_0 = arith.constant 0 : i32
    %c0_i32_1 = arith.constant 0 : i32
    return %c0_i32, %c0_i32_0 : i32, i32
  }
  func.func @transform_3(%arg0: i32, %arg1: i32, %arg2: i32) -> (i32, i32) {
    %c0_i32 = arith.constant 0 : i32
    %c0_i32_0 = arith.constant 0 : i32
    %c0_i32_1 = arith.constant 0 : i32
    return %c0_i32, %c0_i32_0 : i32, i32
  }
  func.func @transform_4(%arg0: i32, %arg1: i32, %arg2: i32) -> (i32, i32) {
    %c0_i32 = arith.constant 0 : i32
    %c0_i32_0 = arith.constant 0 : i32
    %c0_i32_1 = arith.constant 0 : i32
    return %c0_i32, %c0_i32_0 : i32, i32
  }
  func.func @transform_5(%arg0: i32, %arg1: i32, %arg2: i32) -> (i32, i32) {
    %c0_i32 = arith.constant 0 : i32
    %c0_i32_0 = arith.constant 0 : i32
    %c0_i32_1 = arith.constant 0 : i32
    return %c0_i32, %c0_i32_0 : i32, i32
  }
  func.func @transform_6(%arg0: i32, %arg1: i32, %arg2: i32) -> i32 {
    %c0_i32 = arith.constant 0 : i32
    %c0_i32_0 = arith.constant 0 : i32
    return %c0_i32 : i32
  }
  func.func @transform_7(%arg0: i32, %arg1: i32, %arg2: i32) -> (i32, i32, i32) {
    %c2_i32 = arith.constant 2 : i32
    %0 = arith.cmpi slt, %arg1, %c2_i32 : i32
    %c0_i32 = arith.constant 0 : i32
    %1 = arith.select %0, %c0_i32, %arg2 : i32
    %c0_i32_0 = arith.constant 0 : i32
    %c0_i32_1 = arith.constant 0 : i32
    return %arg0, %c0_i32_0, %1 : i32, i32, i32
  }
}

</mosaic_0001>

<llo_original>
// kernel: tpu_custom_call.1
$region0: #{tpu_custom_call.1}
  #allocation0 [shape = 'u32[]', space=smem, size = 0x4, offset = 0x4, fixed_abs, tag = 'smem constant byte address 0x4 - core index']
  #allocation1 [shape = 'u32[144,128]{1,0:T(1,128)}', space=vmem, size = 0x12000, scoped, tag = 'internal scratch']
  #allocation2 [shape = 'f32[4,1]{1,0:T(4,128)}', space=vmem, size = 0x800, scoped, tag = 'scratch operand']
  #allocation3 [shape = 'f32[4,1]{1,0:T(4,128)}', space=vmem, size = 0x800, scoped, tag = 'scratch operand']
  #allocation4 [shape = 'f32[4,1]{1,0:T(4,128)}', space=vmem, size = 0x800, scoped, tag = 'scratch operand']
  #allocation5 [shape = 'f32[1,1]{1,0:T(1,128)}', space=vmem, size = 0x200, scoped, tag = 'scratch operand']
  #allocation6 [shape = 'f32[1,1]{1,0:T(1,128)}', space=vmem, size = 0x200, scoped, tag = 'scratch operand']
  #allocation7 [shape = 'f32[1,1]{1,0:T(1,128)}', space=vmem, size = 0x200, scoped, tag = 'scratch operand']
  #allocation8 [shape = 'f32[1,1]{1,0:T(1,128)}', space=vmem, size = 0x200, scoped, tag = 'scratch operand']
  #allocation9 [shape = 'f32[1,1]{1,0:T(1,128)}', space=vmem, size = 0x200, scoped, tag = 'scratch operand']
  #allocation10 [shape = 'f32[1,1]{1,0:T(1,128)}', space=vmem, size = 0x200, scoped, tag = 'scratch operand']
  #allocation11 [shape = 'f32[4,5]{1,0:T(4,128)}', space=vmem, size = 0x800, scoped, tag = 'scratch operand']
  #allocation12 [shape = 'f32[5,1]{1,0:T(8,128)}', space=vmem, size = 0x1000, scoped, tag = 'scratch operand']
  #allocation13 [shape = 'f32[5,1]{1,0:T(8,128)}', space=vmem, size = 0x1000, scoped, tag = 'scratch operand']
  #allocation14 [shape = 'f32[1,1]{1,0:T(1,128)}', space=vmem, size = 0x200, scoped, tag = 'scratch operand']
  #allocation15 [shape = 'f32[1,1]{1,0:T(1,128)}', space=vmem, size = 0x200, scoped, tag = 'scratch operand']
  #allocation16 [shape = 'f32[1,4,512]{2,1,0:T(4,128)}', space=vmem, size = 0x2000, scoped, tag = 'scratch operand']
  #allocation17 [shape = 'f32[1,1,512]{2,1,0:T(1,128)}', space=vmem, size = 0x800, scoped, tag = 'scratch operand']
  #allocation18 [shape = 'f32[1,1,512]{2,1,0:T(1,128)}', space=vmem, size = 0x800, scoped, tag = 'scratch operand']
  #allocation19 [shape = 'f32[1]{0:T(128)S(6)}', space=smem, size = 0x200, scoped, tag = 'scoped memory for tpu_custom_call.1']
  %s0 = inlined_call_operand.hbm [shape: f32[2,4,512], index: 0, kind: input, shape index: {}]
  %s1 = inlined_call_operand.vmem [shape: f32[2,1,512], index: 1, kind: input, shape index: {}]
  %s2 = inlined_call_operand.vmem [shape: f32[4,5], index: 2, kind: input, shape index: {}]
  %s3 = inlined_call_operand.vmem [shape: f32[5,1], index: 3, kind: input, shape index: {}]
  %s4 = inlined_call_operand.vmem [shape: f32[5,1], index: 4, kind: input, shape index: {}]
  %s5 = inlined_call_operand.vmem [shape: f32[5,1], index: 5, kind: input, shape index: {}]
  %s6 = inlined_call_operand.<no memory space> [shape: f32[1], index: 6, kind: input, shape index: {}]
  %s7 = inlined_call_operand.hbm [shape: f32[2,1,512], index: 7, kind: output, shape index: {}]
  %s8 = sld [smem:[#allocation0]]
  $region89: #{tpu_custom_call.1} parent=0
    _
  %s10 = ssub.s32 1, %s8
  %s11 = scalar_select 0, %s10, %s8
  %12 = sst [smem:[#allocation19]] %s6
  $region1: #{tpu_custom_call.1} parent=0
    #allocation20 [shape = 'u8[16384]{0}', space=vmem, size = 0x4000, scoped, tag = 'input window, operand 0']
    #allocation21 [shape = 's32[2]{0}', space=sflag, size = 0x8, scoped, tag = 'scoped memory for tpu_custom_call.1']
    #allocation22 [shape = 's32[2]{0}', space=sflag, size = 0x8, scoped, tag = 'scoped memory for tpu_custom_call.1']
    #allocation23 [shape = 'u8[4096]{0}', space=vmem, size = 0x1000, scoped, tag = 'output window, operand 0']
    %13 = vsyncpa [#allocation21], 0
    %s14 = scalar_lea.sflag [#allocation21], 1
    %15 = vsyncpa %s14, 0
    %16 = vsyncpa [#allocation22], 0
    %s17 = scalar_lea.sflag [#allocation22], 1
    %18 = vsyncpa %s17, 0
    loop: start=0, step=1, limit=8
    $region2: #{tpu_custom_call.1} parent=1 // loop_pre_header
      _
    $region3: #{tpu_custom_call.1} parent=1 // loop_header
      %s20 = sphi 0, %s24
      %p21 = scmp.ge.s32.totalorder %s20, 8
      %s27 = sphi 0, %s46
      %s28 = sphi 0, %s42
      %s29 = sphi 0, %s38
      %s30 = sphi 0, %s27
      %s31 = sphi 0, %s28
      %s32 = sphi 0, %s29
      %s33 = sphi 0, %s30
      %s34 = sphi 0, %s31
      %s35 = sphi 0, %s32
      %s55 = sphi 0, %s57
      %s58 = sphi 0, %s55
      %s59 = sphi 0, %s58
      %s75 = sphi 0, %s59
      %s87 = sphi 0, %s89
      %s90 = sphi 0, %s87
      %s91 = sphi 0, %s90
      %s107 = sphi 0, %s91
      %s111 = sphi 0, %s111
      %s113 = sphi 0, %s111
      %s114 = sphi 0, %s113
      %s128 = sphi 0, %s114
      %s132 = sphi 0, %s132
      %s134 = sphi 0, %s132
      %s135 = sphi 0, %s134
      %s149 = sphi 0, %s135
      %s153 = sphi 0, %s153
      %s155 = sphi 0, %s153
      %s156 = sphi 0, %s155
      %s170 = sphi 0, %s156
      %s174 = sphi 0, %s174
      %s176 = sphi 0, %s174
      %s177 = sphi 0, %s176
      %s191 = sphi 0, %s177
      %s195 = sphi 0, %s195
      %s197 = sphi 0, %s195
      %s198 = sphi 0, %s197
      %s212 = sphi 0, %s198
      %s224 = sphi 0, %s226
      %s227 = sphi 0, %s224
      %s228 = sphi 0, %s227
      %s244 = sphi 0, %s228
    $region4: #{tpu_custom_call.1} parent=1 // loop_header_branch
      %23 = sbr.rel (%p21) target = $region8
    $region5: #{tpu_custom_call.1} parent=1 // loop_body
      %s25 = ssub.s32 %s20, 1
      %s26 = ssub.s32 %s20, 2
      %s36 = sadd.s32 1, %s29
      %p37 = scmp.ge.s32.totalorder %s36, 1
      %s38 = scalar_select %p37, 0, %s36
      %s39 = sadd.s32 1, %s28
      %s40 = scalar_select %p37, %s39, %s28
      %p41 = scmp.ge.s32.totalorder %s40, 3
      %s42 = scalar_select %p41, 0, %s40
      %s43 = sadd.s32 1, %s27
      %s44 = scalar_select %p41, %s43, %s27
      %p45 = scmp.ge.s32.totalorder %s44, 2
      %s46 = scalar_select %p45, 0, %s44
      %p47 = scmp.le.s32.totalorder %s28, 0
      %s48 = scalar_select %p47, %s29, 0
      %p49 = scmp.le.s32.totalorder %s42, 0
      %s50 = scalar_select %p49, %s38, 0
      %s51 = ssub.s32 %s27, %s46
      %s52 = ssub.s32 %s48, %s50
      %s53 = sor.u32 %s51, %s52
      %p54 = scmp.eq.s32.totalorder %s53, 0
      %s56 = sadd.s32 %s55, 1
      %s57 = scalar_select %p54, %s55, %s56
      %p60 = pneg %p54
      %p61 = scmp.eq.s32.totalorder %s20, 5
      %p62 = por %p60, %p61
      %p63 = scmp.ne.s32.totalorder %s55, %s58
      %p64 = scmp.eq.s32.totalorder %s20, 0
      %p65 = por %p63, %p64
      %p66 = scmp.ne.s32.totalorder %s55, %s58
      %p67 = scmp.eq.s32.totalorder %s25, 5
      %p68 = por %p66, %p67
      %p69 = scmp.ne.s32.totalorder %s58, %s59
      %p70 = scmp.eq.s32.totalorder %s25, 0
      %p71 = por %p69, %p70
      %p72 = scmp.ne.s32.totalorder %s58, %s59
      %p73 = scmp.eq.s32.totalorder %s26, 5
      %p74 = por %p72, %p73
      %p76 = scmp.ne.s32.totalorder %s59, %s75
      %p77 = scmp.eq.s32.totalorder %s26, 0
      %p78 = por %p76, %p77
      %p79 = scmp.le.s32.totalorder %s28, 0
      %s80 = scalar_select %p79, %s29, 0
      %p81 = scmp.le.s32.totalorder %s42, 0
      %s82 = scalar_select %p81, %s38, 0
      %s83 = ssub.s32 %s27, %s46
      %s84 = ssub.s32 %s80, %s82
      %s85 = sor.u32 %s83, %s84
      %p86 = scmp.eq.s32.totalorder %s85, 0
      %s88 = sadd.s32 %s87, 1
      %s89 = scalar_select %p86, %s87, %s88
      %p92 = pneg %p86
      %p93 = scmp.eq.s32.totalorder %s20, 5
      %p94 = por %p92, %p93
      %p95 = scmp.ne.s32.totalorder %s87, %s90
      %p96 = scmp.eq.s32.totalorder %s20, 0
      %p97 = por %p95, %p96
      %p98 = scmp.ne.s32.totalorder %s87, %s90
      %p99 = scmp.eq.s32.totalorder %s25, 5
      %p100 = por %p98, %p99
      %p101 = scmp.ne.s32.totalorder %s90, %s91
      %p102 = scmp.eq.s32.totalorder %s25, 0
      %p103 = por %p101, %p102
      %p104 = scmp.ne.s32.totalorder %s90, %s91
      %p105 = scmp.eq.s32.totalorder %s26, 5
      %p106 = por %p104, %p105
      %p108 = scmp.ne.s32.totalorder %s91, %s107
      %p109 = scmp.eq.s32.totalorder %s26, 0
      %p110 = por %p108, %p109
      %s112 = sadd.s32 %s111, 1
      %p115 = scmp.eq.s32.totalorder %s20, 5
      %p116 = scmp.ne.s32.totalorder %s111, %s113
      %p117 = scmp.eq.s32.totalorder %s20, 0
      %p118 = por %p116, %p117
      %p119 = scmp.ne.s32.totalorder %s111, %s113
      %p120 = scmp.eq.s32.totalorder %s25, 5
      %p121 = por %p119, %p120
      %p122 = scmp.ne.s32.totalorder %s113, %s114
      %p123 = scmp.eq.s32.totalorder %s25, 0
      %p124 = por %p122, %p123
      %p125 = scmp.ne.s32.totalorder %s113, %s114
      %p126 = scmp.eq.s32.totalorder %s26, 5
      %p127 = por %p125, %p126
      %p129 = scmp.ne.s32.totalorder %s114, %s128
      %p130 = scmp.eq.s32.totalorder %s26, 0
      %p131 = por %p129, %p130
      %s133 = sadd.s32 %s132, 1
      %p136 = scmp.eq.s32.totalorder %s20, 5
      %p137 = scmp.ne.s32.totalorder %s132, %s134
      %p138 = scmp.eq.s32.totalorder %s20, 0
      %p139 = por %p137, %p138
      %p140 = scmp.ne.s32.totalorder %s132, %s134
      %p141 = scmp.eq.s32.totalorder %s25, 5
      %p142 = por %p140, %p141
      %p143 = scmp.ne.s32.totalorder %s134, %s135
      %p144 = scmp.eq.s32.totalorder %s25, 0
      %p145 = por %p143, %p144
      %p146 = scmp.ne.s32.totalorder %s134, %s135
      %p147 = scmp.eq.s32.totalorder %s26, 5
      %p148 = por %p146, %p147
      %p150 = scmp.ne.s32.totalorder %s135, %s149
      %p151 = scmp.eq.s32.totalorder %s26, 0
      %p152 = por %p150, %p151
      %s154 = sadd.s32 %s153, 1
      %p157 = scmp.eq.s32.totalorder %s20, 5
      %p158 = scmp.ne.s32.totalorder %s153, %s155
      %p159 = scmp.eq.s32.totalorder %s20, 0
      %p160 = por %p158, %p159
      %p161 = scmp.ne.s32.totalorder %s153, %s155
      %p162 = scmp.eq.s32.totalorder %s25, 5
      %p163 = por %p161, %p162
      %p164 = scmp.ne.s32.totalorder %s155, %s156
      %p165 = scmp.eq.s32.totalorder %s25, 0
      %p166 = por %p164, %p165
      %p167 = scmp.ne.s32.totalorder %s155, %s156
      %p168 = scmp.eq.s32.totalorder %s26, 5
      %p169 = por %p167, %p168
      %p171 = scmp.ne.s32.totalorder %s156, %s170
      %p172 = scmp.eq.s32.totalorder %s26, 0
      %p173 = por %p171, %p172
      %s175 = sadd.s32 %s174, 1
      %p178 = scmp.eq.s32.totalorder %s20, 5
      %p179 = scmp.ne.s32.totalorder %s174, %s176
      %p180 = scmp.eq.s32.totalorder %s20, 0
      %p181 = por %p179, %p180
      %p182 = scmp.ne.s32.totalorder %s174, %s176
      %p183 = scmp.eq.s32.totalorder %s25, 5
      %p184 = por %p182, %p183
      %p185 = scmp.ne.s32.totalorder %s176, %s177
      %p186 = scmp.eq.s32.totalorder %s25, 0
      %p187 = por %p185, %p186
      %p188 = scmp.ne.s32.totalorder %s176, %s177
      %p189 = scmp.eq.s32.totalorder %s26, 5
      %p190 = por %p188, %p189
      %p192 = scmp.ne.s32.totalorder %s177, %s191
      %p193 = scmp.eq.s32.totalorder %s26, 0
      %p194 = por %p192, %p193
      %s196 = sadd.s32 %s195, 1
      %p199 = scmp.eq.s32.totalorder %s20, 5
      %p200 = scmp.ne.s32.totalorder %s195, %s197
      %p201 = scmp.eq.s32.totalorder %s20, 0
      %p202 = por %p200, %p201
      %p203 = scmp.ne.s32.totalorder %s195, %s197
      %p204 = scmp.eq.s32.totalorder %s25, 5
      %p205 = por %p203, %p204
      %p206 = scmp.ne.s32.totalorder %s197, %s198
      %p207 = scmp.eq.s32.totalorder %s25, 0
      %p208 = por %p206, %p207
      %p209 = scmp.ne.s32.totalorder %s197, %s198
      %p210 = scmp.eq.s32.totalorder %s26, 5
      %p211 = por %p209, %p210
      %p213 = scmp.ne.s32.totalorder %s198, %s212
      %p214 = scmp.eq.s32.totalorder %s26, 0
      %p215 = por %p213, %p214
      %p216 = scmp.lt.s32.totalorder %s28, 2
      %s217 = scalar_select %p216, 0, %s29
      %p218 = scmp.lt.s32.totalorder %s42, 2
      %s219 = scalar_select %p218, 0, %s38
      %s220 = ssub.s32 %s27, %s46
      %s221 = ssub.s32 %s217, %s219
      %s222 = sor.u32 %s220, %s221
      %p223 = scmp.eq.s32.totalorder %s222, 0
      %s225 = sadd.s32 %s224, 1
      %s226 = scalar_select %p223, %s224, %s225
      %p229 = pneg %p223
      %p230 = scmp.eq.s32.totalorder %s20, 5
      %p231 = por %p229, %p230
      %p232 = scmp.ne.s32.totalorder %s224, %s227
      %p233 = scmp.eq.s32.totalorder %s20, 0
      %p234 = por %p232, %p233
      %p235 = scmp.ne.s32.totalorder %s224, %s227
      %p236 = scmp.eq.s32.totalorder %s25, 5
      %p237 = por %p235, %p236
      %p238 = scmp.ne.s32.totalorder %s227, %s228
      %p239 = scmp.eq.s32.totalorder %s25, 0
      %p240 = por %p238, %p239
      %p241 = scmp.ne.s32.totalorder %s227, %s228
      %p242 = scmp.eq.s32.totalorder %s26, 5
      %p243 = por %p241, %p242
      %p245 = scmp.ne.s32.totalorder %s228, %s244
      %p246 = scmp.eq.s32.totalorder %s26, 0
      %p247 = por %p245, %p246
      %p248 = scmp.le.s32.totalorder 1, %s20
      %p249 = scmp.lt.s32.totalorder %s20, 7
      %p250 = pnand %p248, %p249
      %p251 = pneg %p250
      // Predicated region
      $region9: #{tpu_custom_call.1} parent=5 // pred_check
        _
      $region10: #{tpu_custom_call.1} parent=5 // pred_check_branch
        %253 = sbr.rel (%p250) target = $region12
      $region11: #{tpu_custom_call.1} parent=5 // pred_region
        %s254 = ssub.s32 %s20, 1
        // Predicated region
        $region13: #{tpu_custom_call.1} parent=11 // pred_check
          %p255 = pneg %p124
        $region14: #{tpu_custom_call.1} parent=11 // pred_check_branch
          %257 = sbr.rel (%p255) target = $region16
        $region15: #{tpu_custom_call.1} parent=11 // pred_region
          _
        $region16: #{tpu_custom_call.1} parent=11 // pred_fallthru
          _
        // Predicated region
        $region17: #{tpu_custom_call.1} parent=11 // pred_check
          %p258 = pneg %p145
        $region18: #{tpu_custom_call.1} parent=11 // pred_check_branch
          %260 = sbr.rel (%p258) target = $region20
        $region19: #{tpu_custom_call.1} parent=11 // pred_region
          _
        $region20: #{tpu_custom_call.1} parent=11 // pred_fallthru
          _
        // Predicated region
        $region21: #{tpu_custom_call.1} parent=11 // pred_check
          %p261 = pneg %p166
        $region22: #{tpu_custom_call.1} parent=11 // pred_check_branch
          %263 = sbr.rel (%p261) target = $region24
        $region23: #{tpu_custom_call.1} parent=11 // pred_region
          _
        $region24: #{tpu_custom_call.1} parent=11 // pred_fallthru
          _
        // Predicated region
        $region25: #{tpu_custom_call.1} parent=11 // pred_check
          %p264 = pneg %p187
        $region26: #{tpu_custom_call.1} parent=11 // pred_check_branch
          %266 = sbr.rel (%p264) target = $region28
        $region27: #{tpu_custom_call.1} parent=11 // pred_region
          _
        $region28: #{tpu_custom_call.1} parent=11 // pred_fallthru
          _
        // Predicated region
        $region29: #{tpu_custom_call.1} parent=11 // pred_check
          %p267 = pneg %p208
        $region30: #{tpu_custom_call.1} parent=11 // pred_check_branch
          %269 = sbr.rel (%p267) target = $region32
        $region31: #{tpu_custom_call.1} parent=11 // pred_region
          _
        $region32: #{tpu_custom_call.1} parent=11 // pred_fallthru
          _
      $region12: #{tpu_custom_call.1} parent=5 // pred_fallthru
        _
      %p270 = scmp.lt.s32.totalorder %s20, 6
      // Predicated region
      $region33: #{tpu_custom_call.1} parent=5 // pred_check
        %p271 = pneg %p270
      $region34: #{tpu_custom_call.1} parent=5 // pred_check_branch
        %273 = sbr.rel (%p271) target = $region36
      $region35: #{tpu_custom_call.1} parent=5 // pred_region
        // Predicated region
        $region37: #{tpu_custom_call.1} parent=35 // pred_check
          %p274 = pneg %p65
        $region38: #{tpu_custom_call.1} parent=35 // pred_check_branch
          %276 = sbr.rel (%p274) target = $region40
        $region39: #{tpu_custom_call.1} parent=35 // pred_region
          %s277 = sand.u32 %s55, 1
          %s278 = scalar_lea.sflag [#allocation21], %s277
          %s279 = sand.u32 %s55, 1
          %s280 = smul.addr %s279, 16
          %s281 = scalar_lea.vmem [#allocation20], %s280
          %p282 = scmp.le.s32.totalorder %s28, 0
          %s283 = scalar_select %p282, %s29, 0
          %s284 = smul.u32 4, %s283
          %s286 = ssub.s32 256, 256
          %287 = vsyncadd %s278, %s286
          %s288 = smul.addr %s27, 4
          %s289 = sadd.s32 %s284, %s288
          %s290 = smul.addr %s289, 64
          %s291 = scalar_lea.hbm %s0, %s290
          %s293 = sshll.u32 %s281, 4
          %s294 = int_to_ptr.vmem [resolvable:$true] %s293
          %296 = dma.hbm_to_vmem [thread:$0]  %s291, 256, %s294, %s278
        $region40: #{tpu_custom_call.1} parent=35 // pred_fallthru
          _
        // Predicated region
        $region41: #{tpu_custom_call.1} parent=35 // pred_check
          %p297 = pneg %p97
        $region42: #{tpu_custom_call.1} parent=35 // pred_check_branch
          %299 = sbr.rel (%p297) target = $region44
        $region43: #{tpu_custom_call.1} parent=35 // pred_region
          %p300 = scmp.le.s32.totalorder %s28, 0
          %s301 = scalar_select %p300, %s29, 0
          %s302 = smul.u32 4, %s301
          %p303 = scmp.lt.s32.totalorder %s27, 1
          %s304 = scalar_select %p303, %s27, 1
          %p305 = scmp.lt.s32.totalorder %s302, 3
          %s306 = scalar_select %p305, %s302, 3
          %s307 = smul.addr %s304, 4
          %s308 = sadd.s32 %s306, %s307
          %s309 = scalar_lea.vmem %s1, %s308
          %p310 = scmp.le.s32.totalorder %s28, 0
          %s311 = scalar_select %p310, %s29, 0
          %s312 = smul.u32 4, %s311
        $region44: #{tpu_custom_call.1} parent=35 // pred_fallthru
          _
      $region36: #{tpu_custom_call.1} parent=5 // pred_fallthru
        _
      %p313 = scmp.le.s32.totalorder 1, %s20
      %p314 = scmp.lt.s32.totalorder %s20, 7
      %p315 = pnand %p313, %p314
      %p316 = pneg %p315
      // Predicated region
      $region45: #{tpu_custom_call.1} parent=5 // pred_check
        _
      $region46: #{tpu_custom_call.1} parent=5 // pred_check_branch
        %318 = sbr.rel (%p315) target = $region48
      $region47: #{tpu_custom_call.1} parent=5 // pred_region
        %s319 = ssub.s32 %s20, 1
        %s320 = sand.u32 %s58, 1
        %s321 = scalar_lea.sflag [#allocation21], %s320
        %s322 = sand.u32 %s58, 1
        %s323 = smul.addr %s322, 16
        %s324 = scalar_lea.vmem [#allocation20], %s323
        // Predicated region
        $region49: #{tpu_custom_call.1} parent=47 // pred_check
          %p325 = pneg %p71
        $region50: #{tpu_custom_call.1} parent=47 // pred_check_branch
          %327 = sbr.rel (%p325) target = $region52
        $region51: #{tpu_custom_call.1} parent=47 // pred_region
          %328 = dma.done %s321, 256
        $region52: #{tpu_custom_call.1} parent=47 // pred_fallthru
          _
        %s329 = sand.u32 %s58, 1
        %s330 = scalar_lea.sflag [#allocation21], %s329
        %s331 = sand.u32 %s58, 1
        %s332 = smul.addr %s331, 16
        %s333 = scalar_lea.vmem [#allocation20], %s332
        %p334 = pneg %p71
        %p335 = pneg %p68
        %p336 = scmp.le.s32.totalorder %s31, 0
        %s337 = scalar_select %p336, %s32, 0
        %s338 = smul.u32 4, %s337
        %p339 = scmp.lt.s32.totalorder %s30, 1
        %s340 = scalar_select %p339, %s30, 1
        %p341 = scmp.lt.s32.totalorder %s338, 3
        %s342 = scalar_select %p341, %s338, 3
        %s343 = smul.addr %s340, 4
        %s344 = sadd.s32 %s342, %s343
        %s345 = scalar_lea.vmem %s1, %s344
        %p346 = pneg %p103
        %p347 = pneg %p100
        %p348 = pneg %p124
        %p349 = pneg %p121
        %p350 = pneg %p145
        %p351 = pneg %p142
        %p352 = pneg %p166
        %p353 = pneg %p163
        %p354 = pneg %p187
        %p355 = pneg %p184
        %p356 = pneg %p208
        %p357 = pneg %p205
        %p358 = pneg %p240
        %p359 = pneg %p237
        %s360 = sand.u32 %s227, 1
        %s361 = scalar_lea.sflag [#allocation22], %s360
        %s362 = sand.u32 %s227, 1
        %s363 = smul.addr %s362, 4
        %s364 = scalar_lea.vmem [#allocation23], %s363
        %p365 = scmp.le.s32.totalorder %s31, 0
        %s366 = scalar_select %p365, %s32, 0
        %s367 = smul.u32 4, %s366
        %p368 = scmp.le.s32.totalorder %s31, 0
        %s369 = scalar_select %p368, %s32, 0
        %s370 = smul.u32 4, %s369
        %p371 = scmp.lt.s32.totalorder %s30, 1
        %s372 = scalar_select %p371, %s30, 1
        %p373 = scmp.lt.s32.totalorder %s370, 3
        %s374 = scalar_select %p373, %s370, 3
        %s375 = smul.addr %s372, 4
        %s376 = sadd.s32 %s374, %s375
        %s377 = scalar_lea.vmem %s1, %s376
        %p378 = scmp.le.s32.totalorder %s31, 0
        %s379 = scalar_select %p378, %s32, 0
        %s380 = smul.u32 4, %s379
        %p381 = scmp.lt.s32.totalorder %s31, 2
        %s382 = scalar_select %p381, 0, %s32
        %s383 = smul.u32 4, %s382
        %p384 = scmp.eq.s32.totalorder %s31, 0
        %p385 = scmp.eq.s32.totalorder %s32, 0
        %p386 = pnand %p384, %p385
        %p387 = pneg %p386
        // Predicated region
        $region53: #{tpu_custom_call.1} parent=47 // pred_check
          _
        $region54: #{tpu_custom_call.1} parent=47 // pred_check_branch
          %389 = sbr.rel (%p386) target = $region56
        $region55: #{tpu_custom_call.1} parent=47 // pred_region
          %vm390 = vcmask 3072
          %391 = vst.msk [vmem:[#allocation2] sm:$0xf] %vm390, 0.0
          %392 = vst.msk [vmem:[#allocation3] sm:$0xf] %vm390, 0.0
          %393 = vst.msk [vmem:[#allocation4] sm:$0xf] %vm390, 0.0
          %vm394 = vcmask 0
          %395 = vst.msk [vmem:[#allocation5] sm:$0x1] %vm394, 0.0
          %396 = vst.msk [vmem:[#allocation6] sm:$0x1] %vm394, 0.0
          %397 = vst.msk [vmem:[#allocation7] sm:$0x1] %vm394, 0.0
          %398 = vst.msk [vmem:[#allocation8] sm:$0x1] %vm394, 0.0
          %399 = vst.msk [vmem:[#allocation9] sm:$0x1] %vm394, 0.0
          %400 = vst.msk [vmem:[#allocation10] sm:$0x1] %vm394, 0.0
        $region56: #{tpu_custom_call.1} parent=47 // pred_fallthru
          _
        // Predicated region
        $region57: #{tpu_custom_call.1} parent=47 // pred_check
          %p401 = pneg %p384
        $region58: #{tpu_custom_call.1} parent=47 // pred_check_branch
          %403 = sbr.rel (%p401) target = $region60
        $region59: #{tpu_custom_call.1} parent=47 // pred_region
          %v404 = vld [vmem:[%s324] sm:$0xff]
          %v405 = vld [vmem:[%s324 + $0x8] sm:$0xff]
          %v406 = vld [vmem:[%s377] sm:$0xf]
          %s407 = smul.u32 %s32, 4
          %s408 = smul.addr %s407, 4
          %s409 = scalar_lea.vmem [#allocation16], %s408
          %410 = vst [vmem:[%s409] sm:$0xff] %v404
          %411 = vst [vmem:[%s409 + $0x8] sm:$0xff] %v405
          %s412 = scalar_lea.vmem [#allocation17], %s407
          %v413 = vlaneseq
          %vm414 = vcmp.ge.s32.totalorder %v413, 0
          %vm415 = vcmp.lt.s32.totalorder %v413, 512
          %vm416 = vmand %vm414, %vm415
          %417 = vst.msk [vmem:[%s412] sm:$0xf] %vm416, %v406
          %v420 = vcombine.high %v404, %v404
          %v421 = vcombine.high %v405, %v405
          %vm424 = vcmask 1043456
          %v425 = vsel %vm424, %v404, 0.0
          %v426 = vsel %vm424, %v420, 0.0
          %v427 = vadd.f32 %v425, %v426
          %v428 = vsel %vm424, %v405, 0.0
          %v429 = vadd.f32 %v427, %v428
          %v430 = vsel %vm424, %v421, 0.0
          %v431 = vadd.f32 %v429, %v430
          %432 = vadd.xlane.f32.xlu0 %v431
          %v433 = vpop.xlane.xlu0 %432
          %v434 = vrcp.pop 512.0
          %v435 = vmul.f32 %v433, %v434
          %v437 = vlaneseq
          %v438 = vshrl.u32 %v437, 7
          %v439 = vsub.s32 0, %v438
          %v440 = vrot.slane %v406, %v439
          %v441 = vlaneseq
          %v442 = vshrl.u32 %v441, 7
          %v443 = vsub.s32 1, %v442
          %v444 = vrot.slane %v406, %v443
          %v445 = vlaneseq
          %v446 = vshrl.u32 %v445, 7
          %v447 = vsub.s32 2, %v446
          %v448 = vrot.slane %v406, %v447
          %v449 = vlaneseq
          %v450 = vshrl.u32 %v449, 7
          %v451 = vsub.s32 3, %v450
          %v452 = vrot.slane %v406, %v451
          %vm457 = vcmask 1040384
          %v458 = vsel %vm457, %v440, 0.0
          %v459 = vsel %vm457, %v444, 0.0
          %v460 = vadd.f32 %v458, %v459
          %v461 = vsel %vm457, %v448, 0.0
          %v462 = vadd.f32 %v460, %v461
          %v463 = vsel %vm457, %v452, 0.0
          %v464 = vadd.f32 %v462, %v463
          %465 = vadd.xlane.f32.xlu0 %v464
          %v466 = vpop.xlane.xlu0 %465
          %v467 = vmul.f32 %v466, %v434
          %v470 = vunpack.c.l.s4 839922192
          %v471 = vunpack.c.0.s8 %v470
          %v472 = vlaneseq
          %v473 = vshrl.u32 %v472, 7
          %v474 = vsub.s32 %v471, %v473
          %v475 = vrot.slane %v435, %v474
          %v477 = vsub.f32 %v404, %v475
          %v478 = vsub.f32 %v405, %v475
          %v480 = vlaneseq
          %v481 = vshrl.u32 %v480, 7
          %v482 = vsub.s32 0, %v481
          %v483 = vrot.slane %v467, %v482
          %v485 = vsub.f32 %v406, %v483
          %v486 = vld [vmem:[#allocation2] sm:$0xf]
          %v487 = vadd.f32 %v486, %v435
          %vm488 = vcmask 3072
          %489 = vst.msk [vmem:[#allocation2] sm:$0xf] %vm488, %v487
          %v490 = vld [vmem:[#allocation3] sm:$0xf]
          %v491 = vmul.f32 %v435, %v435
          %v492 = vadd.f32 %v490, %v491
          %493 = vst.msk [vmem:[#allocation3] sm:$0xf] %vm488, %v492
          %v494 = vld [vmem:[#allocation4] sm:$0xf]
          %v495 = vmul.f32 %v477, %v477
          %v496 = vmul.f32 %v478, %v478
          %v499 = vcombine.high %v495, %v495
          %v500 = vcombine.high %v496, %v496
          %v503 = vsel %vm424, %v495, 0.0
          %v504 = vsel %vm424, %v499, 0.0
          %v505 = vadd.f32 %v503, %v504
          %v506 = vsel %vm424, %v496, 0.0
          %v507 = vadd.f32 %v505, %v506
          %v508 = vsel %vm424, %v500, 0.0
          %v509 = vadd.f32 %v507, %v508
          %510 = vadd.xlane.f32.xlu0 %v509
          %v511 = vpop.xlane.xlu0 %510
          %v512 = vadd.f32 %v494, %v511
          %513 = vst.msk [vmem:[#allocation4] sm:$0xf] %vm488, %v512
          %v514 = vld [vmem:[#allocation5] sm:$0x1]
          %v515 = vadd.f32 %v514, %v467
          %vm516 = vcmask 0
          %517 = vst.msk [vmem:[#allocation5] sm:$0x1] %vm516, %v515
          %v518 = vld [vmem:[#allocation6] sm:$0x1]
          %v519 = vmul.f32 %v467, %v467
          %v520 = vadd.f32 %v518, %v519
          %521 = vst.msk [vmem:[#allocation6] sm:$0x1] %vm516, %v520
          %v522 = vld [vmem:[#allocation7] sm:$0x1]
          %v523 = vmul.f32 %v485, %v485
          %v525 = vlaneseq
          %v526 = vshrl.u32 %v525, 7
          %v527 = vsub.s32 0, %v526
          %v528 = vrot.slane %v523, %v527
          %v529 = vlaneseq
          %v530 = vshrl.u32 %v529, 7
          %v531 = vsub.s32 1, %v530
          %v532 = vrot.slane %v523, %v531
          %v533 = vlaneseq
          %v534 = vshrl.u32 %v533, 7
          %v535 = vsub.s32 2, %v534
          %v536 = vrot.slane %v523, %v535
          %v537 = vlaneseq
          %v538 = vshrl.u32 %v537, 7
          %v539 = vsub.s32 3, %v538
          %v540 = vrot.slane %v523, %v539
          %v545 = vsel %vm457, %v528, 0.0
          %v546 = vsel %vm457, %v532, 0.0
          %v547 = vadd.f32 %v545, %v546
          %v548 = vsel %vm457, %v536, 0.0
          %v549 = vadd.f32 %v547, %v548
          %v550 = vsel %vm457, %v540, 0.0
          %v551 = vadd.f32 %v549, %v550
          %552 = vadd.xlane.f32.xlu0 %v551
          %v553 = vpop.xlane.xlu0 %552
          %v554 = vadd.f32 %v522, %v553
          %555 = vst.msk [vmem:[#allocation7] sm:$0x1] %vm516, %v554
        $region60: #{tpu_custom_call.1} parent=47 // pred_fallthru
          _
        %p556 = scmp.eq.s32.totalorder %s31, 1
        %p557 = pnand %p556, %p385
        %p558 = pneg %p557
        // Predicated region
        $region61: #{tpu_custom_call.1} parent=47 // pred_check
          _
        $region62: #{tpu_custom_call.1} parent=47 // pred_check_branch
          %560 = sbr.rel (%p557) target = $region64
        $region63: #{tpu_custom_call.1} parent=47 // pred_region
          %v561 = vld [vmem:[#allocation2] sm:$0xf]
          %v562 = vld [vmem:[#allocation4] sm:$0xf]
          %v563 = vmul.f32 %v562, 0.001953125
          %v564 = vld [vmem:[#allocation3] sm:$0xf]
          %v565 = vadd.f32 %v563, %v564
          %v566 = vmul.f32 %v561, %v561
          %v567 = vsub.f32 %v565, %v566
          %v568 = vadd.f32 %v567, 1e-05
          %v569 = vrsqrt.pop %v568
          %v570 = vld [vmem:[#allocation5] sm:$0x1]
          %v571 = vld [vmem:[#allocation7] sm:$0x1]
          %v572 = vmul.f32 %v571, 0.001953125
          %v573 = vld [vmem:[#allocation6] sm:$0x1]
          %v574 = vadd.f32 %v572, %v573
          %v575 = vmul.f32 %v570, %v570
          %v576 = vsub.f32 %v574, %v575
          %v577 = vadd.f32 %v576, 1e-05
          %v578 = vrsqrt.pop %v577
          %v579 = vld [vmem:[%s2] sm:$0xf]
          %581 = vset.pattern.permute.xlu0 0
          %582 = vperm.xlu0 %581, %v569
          %v583 = vpop.permute.xlu0 %582
          %v585 = vmul.f32 %v579, %v583
          %v586 = vld [vmem:[%s3] sm:$0x1f]
          %v588 = vlaneseq
          %v589 = vshrl.u32 %v588, 7
          %v590 = vsub.s32 0, %v589
          %v591 = vrot.slane %v578, %v590
          %v593 = vmul.f32 %v586, %v591
          %vm594 = vcmask 35840
          %595 = vst.msk [vmem:[#allocation11] sm:$0xf] %vm594, %v585
          %vm596 = vcmask 4096
          %597 = vst.msk [vmem:[#allocation12] sm:$0x1f] %vm596, %v593
          %v598 = vld [vmem:[%s4] sm:$0x1f]
          %v600 = vlaneseq
          %v601 = vshrl.u32 %v600, 7
          %v602 = vsub.s32 0, %v601
          %v603 = vrot.slane %v570, %v602
          %v605 = vmul.f32 %v593, %v603
          %v606 = vsub.f32 %v598, %v605
          %607 = vxpose.xlu0.b32.start [1/16] %v585, 128
          %608 = vxpose.xlu0.b32.cont [2/16] 0.0, 128
          %609 = vxpose.xlu0.b32.cont [3/16] 0.0, 128
          %610 = vxpose.xlu0.b32.cont [4/16] 0.0, 128
          %611 = vxpose.xlu0.b32.cont [5/16] 0.0, 128
          %612 = vxpose.xlu0.b32.cont [6/16] 0.0, 128
          %613 = vxpose.xlu0.b32.cont [7/16] 0.0, 128
          %614 = vxpose.xlu0.b32.cont [8/16] 0.0, 128
          %615 = vxpose.xlu0.b32.cont [9/16] 0.0, 128
          %616 = vxpose.xlu0.b32.cont [10/16] 0.0, 128
          %617 = vxpose.xlu0.b32.cont [11/16] 0.0, 128
          %618 = vxpose.xlu0.b32.cont [12/16] 0.0, 128
          %619 = vxpose.xlu0.b32.cont [13/16] 0.0, 128
          %620 = vxpose.xlu0.b32.cont [14/16] 0.0, 128
          %621 = vxpose.xlu0.b32.cont [15/16] 0.0, 128
          %622 = vxpose.xlu0.b32.end [16/16] 0.0, 128
          %v623 = vpop.trf.xlu0
          %v624 = vpop.trf.xlu0
          %v625 = vpop.trf.xlu0
          %v626 = vpop.trf.xlu0
          %v627 = vpop.trf.xlu0
          %v628 = vpop.trf.xlu0
          %v629 = vpop.trf.xlu0
          %v630 = vpop.trf.xlu0
          %v631 = vpop.trf.xlu0
          %v632 = vpop.trf.xlu0
          %v633 = vpop.trf.xlu0
          %v634 = vpop.trf.xlu0
          %v635 = vpop.trf.xlu0
          %v636 = vpop.trf.xlu0
          %v637 = vpop.trf.xlu0
          %v638 = vpop.trf.xlu0
          %vm639 = vcmask 31744
          %v641 = vsel %vm639, %v623, 0
          %vm643 = vcmask 1043456
          %v645 = vsel %vm643, %v561, 0
          %647 = vmatprep.subr.mxu0 0.0
          %648 = vmatpush1.msra.mxu0 %v645
          %649 = vmatprep.subr.mxu0 0.0
          %650 = vmatpush1.msra.mxu0 0.0
          %651 = vmatprep.subr.mxu0 0.0
          %652 = vmatpush1.msra.mxu0 0.0
          %653 = vmatprep.subr.mxu0 0.0
          %654 = vmatpush1.msra.mxu0 0.0
          %655 = vmatprep.subr.mxu0 0.0
          %656 = vmatpush1.msra.mxu0 0.0
          %657 = vmatprep.subr.mxu0 0.0
          %658 = vmatpush1.msra.mxu0 0.0
          %659 = vmatprep.subr.mxu0 0.0
          %660 = vmatpush1.msra.mxu0 0.0
          %661 = vmatprep.subr.mxu0 0.0
          %662 = vmatpush1.msra.mxu0 0.0
          %663 = vmatprep.subr.mxu0 0.0
          %664 = vmatpush1.msra.mxu0 0.0
          %665 = vmatprep.subr.mxu0 0.0
          %666 = vmatpush1.msra.mxu0 0.0
          %667 = vmatprep.subr.mxu0 0.0
          %668 = vmatpush1.msra.mxu0 0.0
          %669 = vmatprep.subr.mxu0 0.0
          %670 = vmatpush1.msra.mxu0 0.0
          %671 = vmatprep.subr.mxu0 0.0
          %672 = vmatpush1.msra.mxu0 0.0
          %673 = vmatprep.subr.mxu0 0.0
          %674 = vmatpush1.msra.mxu0 0.0
          %675 = vmatprep.subr.mxu0 0.0
          %676 = vmatpush1.msra.mxu0 0.0
          %677 = vmatprep.subr.mxu0 0.0
          %678 = vmatpush1.msra.mxu0 0.0
          %679 = vmatprep.subr.mxu0 0.0
          %680 = vmatpush1.msra.mxu0 0.0
          %681 = vmatprep.subr.mxu0 0.0
          %682 = vmatpush1.msra.mxu0 0.0
          %683 = vmatprep.subr.mxu0 0.0
          %684 = vmatpush1.msra.mxu0 0.0
          %685 = vmatprep.subr.mxu0 0.0
          %686 = vmatpush1.msra.mxu0 0.0
          %687 = vmatprep.subr.mxu0 0.0
          %688 = vmatpush1.msra.mxu0 0.0
          %689 = vmatprep.subr.mxu0 0.0
          %690 = vmatpush1.msra.mxu0 0.0
          %691 = vmatprep.subr.mxu0 0.0
          %692 = vmatpush1.msra.mxu0 0.0
          %693 = vmatprep.subr.mxu0 0.0
          %694 = vmatpush1.msra.mxu0 0.0
          %695 = vmatprep.subr.mxu0 0.0
          %696 = vmatpush1.msra.mxu0 0.0
          %697 = vmatprep.subr.mxu0 0.0
          %698 = vmatpush1.msra.mxu0 0.0
          %699 = vmatprep.subr.mxu0 0.0
          %700 = vmatpush1.msra.mxu0 0.0
          %701 = vmatprep.subr.mxu0 0.0
          %702 = vmatpush1.msra.mxu0 0.0
          %703 = vmatprep.subr.mxu0 0.0
          %704 = vmatpush1.msra.mxu0 0.0
          %705 = vmatprep.subr.mxu0 0.0
          %706 = vmatpush1.msra.mxu0 0.0
          %707 = vmatprep.subr.mxu0 0.0
          %708 = vmatpush1.msra.mxu0 0.0
          %709 = vmatprep.subr.mxu0 0.0
          %710 = vmatpush1.msra.mxu0 0.0
          %711 = vmatprep.mubr.f32.mxu0 0.0
          %712 = vmatmul.mubr.f32.gmra.mrb[0].mxu0 %v641
          %v713 = vpop.f32.mrb[0].mxu0
          %v714 = vadd.f32 0.0, %v713
          %v715 = vpop.f32.mrb[0].mxu0
          %716 = vdwg.mxu0
          %v717 = vsub.f32 %v606, %v714
          %718 = vst.msk [vmem:[#allocation13] sm:$0x1f] %vm596, %v717
        $region64: #{tpu_custom_call.1} parent=47 // pred_fallthru
          _
        // Predicated region
        $region65: #{tpu_custom_call.1} parent=47 // pred_check
          %p719 = pneg %p556
        $region66: #{tpu_custom_call.1} parent=47 // pred_check_branch
          %721 = sbr.rel (%p719) target = $region68
        $region67: #{tpu_custom_call.1} parent=47 // pred_region
          %s722 = smul.u32 %s32, 4
          %s723 = smul.addr %s722, 4
          %s724 = scalar_lea.vmem [#allocation16], %s723
          %v725 = vld [vmem:[%s724] sm:$0xff]
          %v726 = vld [vmem:[%s724 + $0x8] sm:$0xff]
          %s727 = scalar_lea.vmem [#allocation17], %s722
          %v728 = vld [vmem:[%s727] sm:$0xf]
          %v729 = vld [vmem:[#allocation11] sm:$0xf]
          %v730 = vld [vmem:[#allocation12] sm:$0x1f]
          %732 = vset.pattern.permute.xlu0 0
          %733 = vperm.xlu0 %732, %v730
          %v734 = vpop.permute.xlu0 %733
          %v737 = vlaneseq
          %v738 = vshrl.u32 %v737, 7
          %v739 = vsub.s32 0, %v738
          %v740 = vrot.slane %v728, %v739
          %v741 = vlaneseq
          %v742 = vshrl.u32 %v741, 7
          %v743 = vsub.s32 1, %v742
          %v744 = vrot.slane %v728, %v743
          %v745 = vlaneseq
          %v746 = vshrl.u32 %v745, 7
          %v747 = vsub.s32 2, %v746
          %v748 = vrot.slane %v728, %v747
          %v749 = vlaneseq
          %v750 = vshrl.u32 %v749, 7
          %v751 = vsub.s32 3, %v750
          %v752 = vrot.slane %v728, %v751
          %v757 = vmul.f32 %v734, %v740
          %v758 = vmul.f32 %v734, %v744
          %v759 = vmul.f32 %v734, %v748
          %v760 = vmul.f32 %v734, %v752
          %761 = vxpose.xlu0.b32.start [1/16] %v729, 128
          %762 = vxpose.xlu0.b32.cont [2/16] 0.0, 128
          %763 = vxpose.xlu0.b32.cont [3/16] 0.0, 128
          %764 = vxpose.xlu0.b32.cont [4/16] 0.0, 128
          %765 = vxpose.xlu0.b32.cont [5/16] 0.0, 128
          %766 = vxpose.xlu0.b32.cont [6/16] 0.0, 128
          %767 = vxpose.xlu0.b32.cont [7/16] 0.0, 128
          %768 = vxpose.xlu0.b32.cont [8/16] 0.0, 128
          %769 = vxpose.xlu0.b32.cont [9/16] 0.0, 128
          %770 = vxpose.xlu0.b32.cont [10/16] 0.0, 128
          %771 = vxpose.xlu0.b32.cont [11/16] 0.0, 128
          %772 = vxpose.xlu0.b32.cont [12/16] 0.0, 128
          %773 = vxpose.xlu0.b32.cont [13/16] 0.0, 128
          %774 = vxpose.xlu0.b32.cont [14/16] 0.0, 128
          %775 = vxpose.xlu0.b32.cont [15/16] 0.0, 128
          %776 = vxpose.xlu0.b32.end [16/16] 0.0, 128
          %v777 = vpop.trf.xlu0
          %v778 = vpop.trf.xlu0
          %v779 = vpop.trf.xlu0
          %v780 = vpop.trf.xlu0
          %v781 = vpop.trf.xlu0
          %v782 = vpop.trf.xlu0
          %v783 = vpop.trf.xlu0
          %v784 = vpop.trf.xlu0
          %v785 = vpop.trf.xlu0
          %v786 = vpop.trf.xlu0
          %v787 = vpop.trf.xlu0
          %v788 = vpop.trf.xlu0
          %v789 = vpop.trf.xlu0
          %v790 = vpop.trf.xlu0
          %v791 = vpop.trf.xlu0
          %v792 = vpop.trf.xlu0
          %v795 = vcombine.high %v725, %v725
          %v796 = vcombine.high %v726, %v726
          %vm797 = vcmask 31744
          %v799 = vsel %vm797, %v777, 0
          %vm801 = vcmask 1043456
          %v802 = vsel %vm801, %v725, 0
          %v804 = vsel %vm801, %v795, 0
          %v806 = vsel %vm801, %v726, 0
          %v808 = vsel %vm801, %v796, 0
          %810 = vmatprep.subr.mxu0 %v804
          %811 = vmatpush1.msra.mxu0 %v802
          %812 = vmatprep.subr.mxu0 0.0
          %813 = vmatpush1.msra.mxu0 0.0
          %814 = vmatprep.subr.mxu0 0.0
          %815 = vmatpush1.msra.mxu0 0.0
          %816 = vmatprep.subr.mxu0 0.0
          %817 = vmatpush1.msra.mxu0 0.0
          %818 = vmatprep.subr.mxu0 0.0
          %819 = vmatpush1.msra.mxu0 0.0
          %820 = vmatprep.subr.mxu0 0.0
          %821 = vmatpush1.msra.mxu0 0.0
          %822 = vmatprep.subr.mxu0 0.0
          %823 = vmatpush1.msra.mxu0 0.0
          %824 = vmatprep.subr.mxu0 0.0
          %825 = vmatpush1.msra.mxu0 0.0
          %826 = vmatprep.subr.mxu0 0.0
          %827 = vmatpush1.msra.mxu0 0.0
          %828 = vmatprep.subr.mxu0 0.0
          %829 = vmatpush1.msra.mxu0 0.0
          %830 = vmatprep.subr.mxu0 0.0
          %831 = vmatpush1.msra.mxu0 0.0
          %832 = vmatprep.subr.mxu0 0.0
          %833 = vmatpush1.msra.mxu0 0.0
          %834 = vmatprep.subr.mxu0 0.0
          %835 = vmatpush1.msra.mxu0 0.0
          %836 = vmatprep.subr.mxu0 0.0
          %837 = vmatpush1.msra.mxu0 0.0
          %838 = vmatprep.subr.mxu0 0.0
          %839 = vmatpush1.msra.mxu0 0.0
          %840 = vmatprep.subr.mxu0 0.0
          %841 = vmatpush1.msra.mxu0 0.0
          %842 = vmatprep.subr.mxu0 0.0
          %843 = vmatpush1.msra.mxu0 0.0
          %844 = vmatprep.subr.mxu0 0.0
          %845 = vmatpush1.msra.mxu0 0.0
          %846 = vmatprep.subr.mxu0 0.0
          %847 = vmatpush1.msra.mxu0 0.0
          %848 = vmatprep.subr.mxu0 0.0
          %849 = vmatpush1.msra.mxu0 0.0
          %850 = vmatprep.subr.mxu0 0.0
          %851 = vmatpush1.msra.mxu0 0.0
          %852 = vmatprep.subr.mxu0 0.0
          %853 = vmatpush1.msra.mxu0 0.0
          %854 = vmatprep.subr.mxu0 0.0
          %855 = vmatpush1.msra.mxu0 0.0
          %856 = vmatprep.subr.mxu0 0.0
          %857 = vmatpush1.msra.mxu0 0.0
          %858 = vmatprep.subr.mxu0 0.0
          %859 = vmatpush1.msra.mxu0 0.0
          %860 = vmatprep.subr.mxu0 0.0
          %861 = vmatpush1.msra.mxu0 0.0
          %862 = vmatprep.subr.mxu0 0.0
          %863 = vmatpush1.msra.mxu0 0.0
          %864 = vmatprep.subr.mxu0 0.0
          %865 = vmatpush1.msra.mxu0 0.0
          %866 = vmatprep.subr.mxu0 0.0
          %867 = vmatpush1.msra.mxu0 0.0
          %868 = vmatprep.subr.mxu0 0.0
          %869 = vmatpush1.msra.mxu0 0.0
          %870 = vmatprep.subr.mxu0 0.0
          %871 = vmatpush1.msra.mxu0 0.0
          %872 = vmatprep.subr.mxu0 0.0
          %873 = vmatpush1.msra.mxu0 0.0
          %874 = vmatprep.mubr.f32.mxu0 0.0
          %875 = vmatmul.mubr.f32.gmra.mrb[0].mxu0 %v799
          %v876 = vpop.f32.mrb[0].mxu0
          %v877 = vadd.f32 %v757, %v876
          %v878 = vpop.f32.mrb[0].mxu0
          %v879 = vadd.f32 %v758, %v878
          %880 = vdwg.mxu0
          %881 = vmatprep.subr.mxu0 %v808
          %882 = vmatpush1.msra.mxu0 %v806
          %883 = vmatprep.subr.mxu0 0.0
          %884 = vmatpush1.msra.mxu0 0.0
          %885 = vmatprep.subr.mxu0 0.0
          %886 = vmatpush1.msra.mxu0 0.0
          %887 = vmatprep.subr.mxu0 0.0
          %888 = vmatpush1.msra.mxu0 0.0
          %889 = vmatprep.subr.mxu0 0.0
          %890 = vmatpush1.msra.mxu0 0.0
          %891 = vmatprep.subr.mxu0 0.0
          %892 = vmatpush1.msra.mxu0 0.0
          %893 = vmatprep.subr.mxu0 0.0
          %894 = vmatpush1.msra.mxu0 0.0
          %895 = vmatprep.subr.mxu0 0.0
          %896 = vmatpush1.msra.mxu0 0.0
          %897 = vmatprep.subr.mxu0 0.0
          %898 = vmatpush1.msra.mxu0 0.0
          %899 = vmatprep.subr.mxu0 0.0
          %900 = vmatpush1.msra.mxu0 0.0
          %901 = vmatprep.subr.mxu0 0.0
          %902 = vmatpush1.msra.mxu0 0.0
          %903 = vmatprep.subr.mxu0 0.0
          %904 = vmatpush1.msra.mxu0 0.0
          %905 = vmatprep.subr.mxu0 0.0
          %906 = vmatpush1.msra.mxu0 0.0
          %907 = vmatprep.subr.mxu0 0.0
          %908 = vmatpush1.msra.mxu0 0.0
          %909 = vmatprep.subr.mxu0 0.0
          %910 = vmatpush1.msra.mxu0 0.0
          %911 = vmatprep.subr.mxu0 0.0
          %912 = vmatpush1.msra.mxu0 0.0
          %913 = vmatprep.subr.mxu0 0.0
          %914 = vmatpush1.msra.mxu0 0.0
          %915 = vmatprep.subr.mxu0 0.0
          %916 = vmatpush1.msra.mxu0 0.0
          %917 = vmatprep.subr.mxu0 0.0
          %918 = vmatpush1.msra.mxu0 0.0
          %919 = vmatprep.subr.mxu0 0.0
          %920 = vmatpush1.msra.mxu0 0.0
          %921 = vmatprep.subr.mxu0 0.0
          %922 = vmatpush1.msra.mxu0 0.0
          %923 = vmatprep.subr.mxu0 0.0
          %924 = vmatpush1.msra.mxu0 0.0
          %925 = vmatprep.subr.mxu0 0.0
          %926 = vmatpush1.msra.mxu0 0.0
          %927 = vmatprep.subr.mxu0 0.0
          %928 = vmatpush1.msra.mxu0 0.0
          %929 = vmatprep.subr.mxu0 0.0
          %930 = vmatpush1.msra.mxu0 0.0
          %931 = vmatprep.subr.mxu0 0.0
          %932 = vmatpush1.msra.mxu0 0.0
          %933 = vmatprep.subr.mxu0 0.0
          %934 = vmatpush1.msra.mxu0 0.0
          %935 = vmatprep.subr.mxu0 0.0
          %936 = vmatpush1.msra.mxu0 0.0
          %937 = vmatprep.subr.mxu0 0.0
          %938 = vmatpush1.msra.mxu0 0.0
          %939 = vmatprep.subr.mxu0 0.0
          %940 = vmatpush1.msra.mxu0 0.0
          %941 = vmatprep.subr.mxu0 0.0
          %942 = vmatpush1.msra.mxu0 0.0
          %943 = vmatprep.subr.mxu0 0.0
          %944 = vmatpush1.msra.mxu0 0.0
          %945 = vmatprep.mubr.f32.mxu0 0.0
          %946 = vmatmul.mubr.f32.gmra.mrb[0].mxu0 %v799
          %v947 = vpop.f32.mrb[0].mxu0
          %v948 = vadd.f32 %v759, %v947
          %v949 = vpop.f32.mrb[0].mxu0
          %v950 = vadd.f32 %v760, %v949
          %951 = vdwg.mxu0
          %v952 = vld [vmem:[#allocation13] sm:$0x1f]
          %954 = vset.pattern.permute.xlu0 0
          %955 = vperm.xlu0 %954, %v952
          %v956 = vpop.permute.xlu0 %955
          %v958 = vadd.f32 %v877, %v956
          %v959 = vadd.f32 %v879, %v956
          %v960 = vadd.f32 %v948, %v956
          %v961 = vadd.f32 %v950, %v956
          %vm962 = vcmp.ge.f32.partialorder %v958, 0.0
          %vm963 = vcmp.ge.f32.partialorder %v959, 0.0
          %vm964 = vcmp.ge.f32.partialorder %v960, 0.0
          %vm965 = vcmp.ge.f32.partialorder %v961, 0.0
          %v966 = vmul.f32 %v958, 0.01
          %v967 = vmul.f32 %v959, 0.01
          %v968 = vmul.f32 %v960, 0.01
          %v969 = vmul.f32 %v961, 0.01
          %v970 = vsel %vm962, %v958, %v966
          %v971 = vsel %vm963, %v959, %v967
          %v972 = vsel %vm964, %v960, %v968
          %v973 = vsel %vm965, %v961, %v969
          %v974 = vld [vmem:[%s5] sm:$0x1f]
          %976 = vset.pattern.permute.xlu0 0
          %977 = vperm.xlu0 %976, %v974
          %v978 = vpop.permute.xlu0 %977
          %v980 = vmul.f32 %v970, %v978
          %v981 = vmul.f32 %v971, %v978
          %v982 = vmul.f32 %v972, %v978
          %v983 = vmul.f32 %v973, %v978
          %vm984 = vcmask 1044480
          %v985 = vsel %vm984, %v980, 0.0
          %v986 = vrot.slane %v985, 4
          %v987 = vadd.f32 %v985, %v986
          %v988 = vrot.slane %v987, 2
          %v989 = vadd.f32 %v987, %v988
          %v990 = vrot.slane %v989, 1
          %v991 = vadd.f32 %v989, %v990
          %v992 = vsel %vm984, %v981, 0.0
          %v993 = vrot.slane %v992, 4
          %v994 = vadd.f32 %v992, %v993
          %v995 = vrot.slane %v994, 2
          %v996 = vadd.f32 %v994, %v995
          %v997 = vrot.slane %v996, 1
          %v998 = vadd.f32 %v996, %v997
          %v999 = vsel %vm984, %v982, 0.0
          %v1000 = vrot.slane %v999, 4
          %v1001 = vadd.f32 %v999, %v1000
          %v1002 = vrot.slane %v1001, 2
          %v1003 = vadd.f32 %v1001, %v1002
          %v1004 = vrot.slane %v1003, 1
          %v1005 = vadd.f32 %v1003, %v1004
          %v1006 = vsel %vm984, %v983, 0.0
          %v1007 = vrot.slane %v1006, 4
          %v1008 = vadd.f32 %v1006, %v1007
          %v1009 = vrot.slane %v1008, 2
          %v1010 = vadd.f32 %v1008, %v1009
          %v1011 = vrot.slane %v1010, 1
          %v1012 = vadd.f32 %v1010, %v1011
          %s1013 = sld [smem:[#allocation19]]
          %v1014 = vstv %s1013
          %v1015 = vadd.f32 %v991, %v1014
          %v1016 = vadd.f32 %v998, %v1014
          %v1017 = vadd.f32 %v1005, %v1014
          %v1018 = vadd.f32 %v1012, %v1014
          %v1019 = vadd.f32 %v1015, %v1016
          %v1020 = vadd.f32 %v1019, %v1017
          %v1021 = vadd.f32 %v1020, %v1018
          %1022 = vadd.xlane.f32.xlu0 %v1021
          %v1023 = vpop.xlane.xlu0 %1022
          %v1024 = vrcp.pop 512.0
          %v1025 = vmul.f32 %v1023, %v1024
          %v1026 = vsub.f32 %v1015, %v1025
          %v1027 = vsub.f32 %v1016, %v1025
          %v1028 = vsub.f32 %v1017, %v1025
          %v1029 = vsub.f32 %v1018, %v1025
          %v1030 = vld [vmem:[#allocation8] sm:$0x1]
          %v1031 = vadd.f32 %v1030, %v1025
          %vm1032 = vcmask 0
          %1033 = vst.msk [vmem:[#allocation8] sm:$0x1] %vm1032, %v1031
          %v1034 = vld [vmem:[#allocation9] sm:$0x1]
          %v1035 = vmul.f32 %v1025, %v1025
          %v1036 = vadd.f32 %v1034, %v1035
          %1037 = vst.msk [vmem:[#allocation9] sm:$0x1] %vm1032, %v1036
          %v1038 = vld [vmem:[#allocation10] sm:$0x1]
          %v1039 = vmul.f32 %v1026, %v1026
          %v1040 = vmul.f32 %v1027, %v1027
          %v1041 = vmul.f32 %v1028, %v1028
          %v1042 = vmul.f32 %v1029, %v1029
          %v1043 = vadd.f32 %v1039, %v1040
          %v1044 = vadd.f32 %v1043, %v1041
          %v1045 = vadd.f32 %v1044, %v1042
          %1046 = vadd.xlane.f32.xlu0 %v1045
          %v1047 = vpop.xlane.xlu0 %1046
          %v1048 = vadd.f32 %v1038, %v1047
          %1049 = vst.msk [vmem:[#allocation10] sm:$0x1] %vm1032, %v1048
          %v1054 = vcombine.low %v1015, %v1016
          %v1055 = vcombine.low %v1017, %v1018
          %v1057 = vunpack.c.l.s4 1966171168
          %v1058 = vunpack.c.0.s8 %v1057
          %v1059 = vlaneseq
          %v1060 = vshrl.u32 %v1059, 7
          %v1061 = vsub.s32 %v1058, %v1060
          %v1062 = vrot.slane %v1054, %v1061
          %v1064 = vunpack.c.l.s4 1966171168
          %v1065 = vunpack.c.0.s8 %v1064
          %v1066 = vlaneseq
          %v1067 = vshrl.u32 %v1066, 7
          %v1068 = vsub.s32 %v1065, %v1067
          %v1069 = vrot.slane %v1055, %v1068
          %v1070 = vcombine.low %v1062, %v1069
          %v1072 = vunpack.c.l.s4 1966171168
          %v1073 = vunpack.c.0.s8 %v1072
          %v1074 = vlaneseq
          %v1075 = vshrl.u32 %v1074, 7
          %v1076 = vsub.s32 %v1073, %v1075
          %v1077 = vrot.slane %v1070, %v1076
          %s1079 = scalar_lea.vmem [#allocation18], %s722
          %v1080 = vlaneseq
          %vm1081 = vcmp.ge.s32.totalorder %v1080, 0
          %vm1082 = vcmp.lt.s32.totalorder %v1080, 512
          %vm1083 = vmand %vm1081, %vm1082
          %1084 = vst.msk [vmem:[%s1079] sm:$0xf] %vm1083, %v1077
        $region68: #{tpu_custom_call.1} parent=47 // pred_fallthru
          _
        %p1085 = scmp.eq.s32.totalorder %s31, 2
        %p1086 = pnand %p1085, %p385
        %p1087 = pneg %p1086
        // Predicated region
        $region69: #{tpu_custom_call.1} parent=47 // pred_check
          _
        $region70: #{tpu_custom_call.1} parent=47 // pred_check_branch
          %1089 = sbr.rel (%p1086) target = $region72
        $region71: #{tpu_custom_call.1} parent=47 // pred_region
          %v1090 = vld [vmem:[#allocation8] sm:$0x1]
          %v1091 = vld [vmem:[#allocation10] sm:$0x1]
          %v1092 = vmul.f32 %v1091, 0.001953125
          %v1093 = vld [vmem:[#allocation9] sm:$0x1]
          %v1094 = vadd.f32 %v1092, %v1093
          %v1095 = vmul.f32 %v1090, %v1090
          %v1096 = vsub.f32 %v1094, %v1095
          %vm1097 = vcmask 0
          %1098 = vst.msk [vmem:[#allocation14] sm:$0x1] %vm1097, %v1090
          %v1099 = vadd.f32 %v1096, 1e-05
          %v1100 = vrsqrt.pop %v1099
          %1101 = vst.msk [vmem:[#allocation15] sm:$0x1] %vm1097, %v1100
        $region72: #{tpu_custom_call.1} parent=47 // pred_fallthru
          _
        // Predicated region
        $region73: #{tpu_custom_call.1} parent=47 // pred_check
          %p1102 = pneg %p1085
        $region74: #{tpu_custom_call.1} parent=47 // pred_check_branch
          %1104 = sbr.rel (%p1102) target = $region76
        $region75: #{tpu_custom_call.1} parent=47 // pred_region
          %s1105 = smul.u32 %s32, 4
          %s1106 = scalar_lea.vmem [#allocation18], %s1105
          %v1107 = vld [vmem:[%s1106] sm:$0xf]
          %v1108 = vld [vmem:[#allocation14] sm:$0x1]
          %1110 = vset.pattern.permute.xlu0 0
          %1111 = vperm.xlu0 %1110, %v1108
          %v1112 = vpop.permute.xlu0 %1111
          %v1114 = vlaneseq
          %v1115 = vshrl.u32 %v1114, 7
          %v1116 = vsub.s32 0, %v1115
          %v1117 = vrot.slane %v1112, %v1116
          %v1118 = vsub.f32 %v1107, %v1117
          %v1119 = vld [vmem:[#allocation15] sm:$0x1]
          %1121 = vset.pattern.permute.xlu0 0
          %1122 = vperm.xlu0 %1121, %v1119
          %v1123 = vpop.permute.xlu0 %1122
          %v1125 = vlaneseq
          %v1126 = vshrl.u32 %v1125, 7
          %v1127 = vsub.s32 0, %v1126
          %v1128 = vrot.slane %v1123, %v1127
          %v1129 = vmul.f32 %v1118, %v1128
          %v1130 = vxor.u32 %v1129, 2147483648
          %v1131 = vmul.f32 %v1130, 1.442695
          %v1132 = vpow.pop %v1131
          %v1133 = vadd.f32 %v1132, 1.0
          %v1134 = vrcp.pop %v1133
          %v1135 = vmul.f32 1.0, %v1134
          %v1136 = vlaneseq
          %vm1137 = vcmp.ge.s32.totalorder %v1136, 0
          %vm1138 = vcmp.lt.s32.totalorder %v1136, 512
          %vm1139 = vmand %vm1137, %vm1138
          %1140 = vst.msk [vmem:[%s364] sm:$0xf] %vm1139, %v1135
        $region76: #{tpu_custom_call.1} parent=47 // pred_fallthru
          _
        %s1141 = sand.u32 %s227, 1
        %s1142 = scalar_lea.sflag [#allocation22], %s1141
        %s1143 = sand.u32 %s227, 1
        %s1144 = smul.addr %s1143, 4
        %s1145 = scalar_lea.vmem [#allocation23], %s1144
        // Predicated region
        $region77: #{tpu_custom_call.1} parent=47 // pred_check
          %p1146 = pneg %p237
        $region78: #{tpu_custom_call.1} parent=47 // pred_check_branch
          %1148 = sbr.rel (%p1146) target = $region80
        $region79: #{tpu_custom_call.1} parent=47 // pred_region
          %p1149 = scmp.lt.s32.totalorder %s31, 2
          %s1150 = scalar_select %p1149, 0, %s32
          %s1151 = smul.u32 4, %s1150
          %s1153 = ssub.s32 64, 64
          %1154 = vsyncadd %s1142, %s1153
          %s1155 = smul.addr %s30, 4
          %s1156 = sadd.s32 %s1151, %s1155
          %s1157 = smul.addr %s1156, 16
          %s1158 = scalar_lea.hbm %s7, %s1157
          %s1160 = sshll.u32 %s1145, 4
          %s1161 = int_to_ptr.vmem [resolvable:$true] %s1160
          %1163 = dma.vmem_to_hbm [thread:$0]  %s1161, 64, %s1158, %s1142
        $region80: #{tpu_custom_call.1} parent=47 // pred_fallthru
          _
      $region48: #{tpu_custom_call.1} parent=5 // pred_fallthru
        _
      %p1164 = scmp.le.s32.totalorder 2, %s20
      // Predicated region
      $region81: #{tpu_custom_call.1} parent=5 // pred_check
        %p1165 = pneg %p1164
      $region82: #{tpu_custom_call.1} parent=5 // pred_check_branch
        %1167 = sbr.rel (%p1165) target = $region84
      $region83: #{tpu_custom_call.1} parent=5 // pred_region
        %s1168 = ssub.s32 %s20, 2
        // Predicated region
        $region85: #{tpu_custom_call.1} parent=83 // pred_check
          %p1169 = pneg %p243
        $region86: #{tpu_custom_call.1} parent=83 // pred_check_branch
          %1171 = sbr.rel (%p1169) target = $region88
        $region87: #{tpu_custom_call.1} parent=83 // pred_region
          %s1172 = sand.u32 %s228, 1
          %s1173 = scalar_lea.sflag [#allocation22], %s1172
          %s1174 = sand.u32 %s228, 1
          %s1175 = smul.addr %s1174, 4
          %s1176 = scalar_lea.vmem [#allocation23], %s1175
          %1177 = dma.done %s1173, 64
        $region88: #{tpu_custom_call.1} parent=83 // pred_fallthru
          _
      $region84: #{tpu_custom_call.1} parent=5 // pred_fallthru
        _
    $region6: #{tpu_custom_call.1} parent=1 // loop_footer
      %s24 = sadd.s32 1, %s20
    $region7: #{tpu_custom_call.1} parent=1 // loop_footer_branch
      %19 = sbr.rel target = $region3
    $region8: #{tpu_custom_call.1} parent=1 // loop_exit
      _
    %1178 = vsyncpa [#allocation21], 1
    %s1179 = scalar_lea.sflag [#allocation21], 1
    %1180 = vsyncpa %s1179, 1
    %1181 = vsyncpa [#allocation22], 1
    %s1182 = scalar_lea.sflag [#allocation22], 1
    %1183 = vsyncpa %s1182, 1

</llo_original>
